<compile_context>
chip_gen: v7x
topology: tpu7x:2x2x1
jax: 0.10.0
libtpu: 0.0.40
codegen_flags: <defaults>
</compile_context>

<pallas_src>
import jax
import jax.numpy as jnp
import numpy as np
from jax.experimental import pallas as pl
from jax.experimental.pallas import tpu as pltpu

PAD = 3                         # union padding (7x7 kernel window)
KW = 2 * PAD + 1                # 7
EPS = 1e-5                      # nn.BatchNorm2d default eps
VMEM_LIMIT = 32 * 1024 * 1024   # scoped-VMEM default on v6e/v7x; safe everywhere
TOEPLITZ_W_BYTES_MAX = 8 * 1024 * 1024
BRANCHES = (                    # (kh, kw, pad_h, pad_w), in torch.cat order
    (5, 3, 2, 1),               # conv53
    (7, 3, 3, 1),               # conv73
    (3, 5, 1, 2),               # conv35
    (3, 7, 1, 3),               # conv37
)
BRANCH_NAMES = ("53", "73", "35", "37")


# --------------------------------------------------------------------------- #
# Pass 1a (small C): fused conv + bias + per-image centered BN partials,      #
# lane-dense (H, W*C) accumulator via a block-Toeplitz weight over W.         #
# --------------------------------------------------------------------------- #
def conv_stats_wdense_kernel(x_ref, w_ref, b_ref, conv_ref, sum_ref, m2_ref,
                             xpad_ref):
    # x_ref: (1, H, W*C) bf16, w_ref: (KW, W*C, W*C) bf16, b_ref: (1, W*C) f32
    _, H, WC = x_ref.shape

    # Pad folded into the kernel: pre-zeroed f32 scratch, centre filled from
    # the unpadded block.  (f32 scratch avoids packed-sublane stores at odd
    # row offsets; slabs are cast to bf16 right before the MXU.)
    xpad_ref[...] = jnp.zeros(xpad_ref.shape, xpad_ref.dtype)
    xpad_ref[PAD:PAD + H, :] = x_ref[0].astype(jnp.float32)

    acc = jnp.zeros((H, WC), jnp.float32)
    for dy in range(KW):                            # static unroll, 7 matmuls
        slab = xpad_ref[dy:dy + H, :].astype(jnp.bfloat16)
        acc = acc + jnp.dot(slab, w_ref[dy],
                            preferred_element_type=jnp.float32)
    acc = acc + b_ref[...]                          # fused conv bias

    conv_ref[0] = acc.astype(conv_ref.dtype)        # bf16, fully lane-dense
    s = jnp.sum(acc, axis=0, keepdims=True)         # (1, W*C) f32 (from f32 acc)
    m = s * (1.0 / H)
    sum_ref[0] = s
    m2_ref[0] = jnp.sum((acc - m) ** 2, axis=0, keepdims=True)


# --------------------------------------------------------------------------- #
# Pass 1b (large C / huge images): dx-stacked im2col, K = KW*C.               #
# --------------------------------------------------------------------------- #
def conv_stats_im2col_kernel(x_ref, w_ref, b_ref, conv_ref, sum_ref, m2_ref,
                             xpad_ref):
    # x_ref: (1, H, W, C) bf16, w_ref: (KW, KW*C, C) bf16, b_ref: (1, C) f32
    _, H, W, C = x_ref.shape

    xpad_ref[...] = jnp.zeros(xpad_ref.shape, xpad_ref.dtype)
    xpad_ref[PAD:PAD + H, PAD:PAD + W, :] = x_ref[0].astype(jnp.float32)
    xp = xpad_ref[...].astype(jnp.bfloat16)                    # (Hp, Wp, C)

    # dx-im2col built once and reused for every dy tap.
    col = jnp.concatenate([xp[:, dx:dx + W, :] for dx in range(KW)],
                          axis=-1)                             # (Hp, W, KW*C)
    acc = jnp.zeros((H * W, C), jnp.float32)
    for dy in range(KW):
        slab = col[dy:dy + H].reshape(H * W, KW * C)           # leading-dim slice
        acc = acc + jnp.dot(slab, w_ref[dy],
                            preferred_element_type=jnp.float32)
    acc = acc + b_ref[...]

    conv_ref[0] = acc.astype(conv_ref.dtype)                   # bf16
    s = jnp.sum(acc, axis=0, keepdims=True)                    # (1, C)
    m = s * (1.0 / (H * W))
    sum_ref[0] = s
    m2_ref[0] = jnp.sum((acc - m) ** 2, axis=0, keepdims=True)


# --------------------------------------------------------------------------- #
# Pass 2: BN-apply + ReLU + residual + ReLU on lane-dense (tile_h, W*C) tiles #
# --------------------------------------------------------------------------- #
def bn_residual_kernel(conv_ref, res_ref, s_ref, t_ref, out_ref):
    y = jnp.maximum(conv_ref[0].astype(jnp.float32) * s_ref[...] + t_ref[...],
                    0.0)
    out_ref[0] = jnp.maximum(y + res_ref[0].astype(jnp.float32),
                             0.0).astype(out_ref.dtype)


# --------------------------------------------------------------------------- #
# Weight / stats helpers (plain JAX, run once under jit)                      #
# --------------------------------------------------------------------------- #
def _fuse_weights(params, C):
    """Zero-pad each branch's taps to the 7x7 union and concat branches along
    the output-channel dim -> (KW, KW, Cin, Cout)."""
    D = C // 4
    wf = jnp.zeros((KW, KW, C, C), jnp.float32)
    for bi, ((kh, kw, ph, pw), name) in enumerate(zip(BRANCHES, BRANCH_NAMES)):
        w = jnp.transpose(params["w" + name], (2, 3, 1, 0))   # OIHW->(kh,kw,Cin,D)
        oh, ow = PAD - ph, PAD - pw
        wf = wf.at[oh:oh + kh, ow:ow + kw, :, bi * D:(bi + 1) * D].set(w)
    return wf


def _toeplitz_weight(wf, W, C):
    """(KW, KW, Cin, Cout) -> block-Toeplitz (KW, W*C, W*C): the dx taps and
    the W output positions live in the MXU contraction / output dims; the
    W-boundary zero padding is encoded as zero blocks."""
    j = jnp.arange(W)[:, None]                      # input column
    w = jnp.arange(W)[None, :]                      # output column
    dx = j - w + PAD                                # (W, W)
    valid = (dx >= 0) & (dx < KW)
    t = wf[:, jnp.clip(dx, 0, KW - 1)]              # (KW, W, W, Cin, Cout)
    t = jnp.where(valid[None, :, :, None, None], t, 0.0)
    t = jnp.transpose(t, (0, 1, 3, 2, 4))           # [dy, j, cin, w, cout]
    return t.reshape(KW, W * C, W * C)


def _bn_fold(g_sum, g_m2, cnt, gamma, beta):
    """Chan-style combine of per-group (sum, centered M2) partials (each group
    has `cnt` elements) -> biased batch stats -> folded BN scale/shift."""
    g_mean = g_sum / cnt
    mean = jnp.mean(g_mean, axis=0)
    m2 = jnp.sum(g_m2, axis=0) + cnt * jnp.sum((g_mean - mean) ** 2, axis=0)
    var = jnp.maximum(m2 / (g_sum.shape[0] * cnt), 0.0)
    s = gamma * jax.lax.rsqrt(var + EPS)            # training-mode (biased var)
    t = beta - mean * s
    return s, t


def _row_tile(h, cap=256):
    if h <= cap:
        return h
    for t in range(cap, 7, -1):
        if h % t == 0 and t % 8 == 0:
            return t
    return h


# --------------------------------------------------------------------------- #
# Wrapper                                                                     #
# --------------------------------------------------------------------------- #
def inception_block(x_nchw, params):
    """NCHW in / NCHW out, parameters in PyTorch layouts."""
    N, C, H, W = x_nchw.shape
    assert C % 4 == 0
    Hp, WC = H + 2 * PAD, W * C

    # TODO(synk): keep the surrounding model NHWC end-to-end so these two
    # transposes (each a full activation HBM round trip in XLA) disappear.
    x_nhwc = jnp.transpose(x_nchw, (0, 2, 3, 1)).astype(jnp.bfloat16)
    x_wc = x_nhwc.reshape(N, H, WC)                 # free contiguous re-view

    wf = _fuse_weights(params, C)
    bias = jnp.concatenate([params["b" + n] for n in BRANCH_NAMES])
    bias = bias.astype(jnp.float32)

    # Explicit path selection (no silent try/except fallback).
    use_wdense = (C % 128 != 0) and (KW * WC * WC * 2 <= TOEPLITZ_W_BYTES_MAX)

    if use_wdense:
        wt = _toeplitz_weight(wf, W, C).astype(jnp.bfloat16)    # (KW, WC, WC)
        b_wc = jnp.tile(bias, W).reshape(1, WC)
        flops = 2 * N * KW * H * WC * WC
        bytes_accessed = (x_wc.size * 2 + wt.size * 2 + b_wc.size * 4
                          + N * H * WC * 2 + 2 * N * WC * 4)
        conv, ssum, sm2 = pl.pallas_call(
            conv_stats_wdense_kernel,
            out_shape=(jax.ShapeDtypeStruct((N, H, WC), jnp.bfloat16),
                       jax.ShapeDtypeStruct((N, 1, WC), jnp.float32),
                       jax.ShapeDtypeStruct((N, 1, WC), jnp.float32)),
            grid_spec=pltpu.PrefetchScalarGridSpec(
                num_scalar_prefetch=0,
                grid=(N,),
                in_specs=[pl.BlockSpec((1, H, WC), lambda n: (n, 0, 0)),
                          # TODO(synk): pipeline_mode=pl.Buffered(1) on this
                          # grid-invariant weight to save one VMEM copy (v7x).
                          pl.BlockSpec((KW, WC, WC), lambda n: (0, 0, 0)),
                          pl.BlockSpec((1, WC), lambda n: (0, 0))],
                out_specs=(pl.BlockSpec((1, H, WC), lambda n: (n, 0, 0)),
                           pl.BlockSpec((1, 1, WC), lambda n: (n, 0, 0)),
                           pl.BlockSpec((1, 1, WC), lambda n: (n, 0, 0))),
                scratch_shapes=[pltpu.VMEM((Hp, WC), jnp.float32)]),
            compiler_params=pltpu.CompilerParams(
                dimension_semantics=("parallel",),
                vmem_limit_bytes=VMEM_LIMIT),
            cost_estimate=pl.CostEstimate(flops=flops, transcendentals=0,
                                          bytes_accessed=bytes_accessed),
        )(x_wc, wt, b_wc)
        conv_wc = conv                               # already (N, H, W*C)
        g_sum = ssum.reshape(N * W, C)               # groups = (n, w), count H
        g_m2 = sm2.reshape(N * W, C)
        cnt = float(H)
    else:
        # TODO(synk): for very large H*W*C on v7x (64 MiB VMEM) add a row-tile
        # grid axis with halo DMA (manual make_async_copy) so the per-step
        # working set stays ~24-32 MiB instead of scaling with the image.
        wt = wf.reshape(KW, KW * C, C).astype(jnp.bfloat16)
        b_c = bias.reshape(1, C)
        flops = 2 * N * H * W * KW * KW * C * C
        bytes_accessed = (x_nhwc.size * 2 + wt.size * 2 + b_c.size * 4
                          + N * H * W * C * 2 + 2 * N * C * 4)
        conv, ssum, sm2 = pl.pallas_call(
            conv_stats_im2col_kernel,
            out_shape=(jax.ShapeDtypeStruct((N, H * W, C), jnp.bfloat16),
                       jax.ShapeDtypeStruct((N, 1, C), jnp.float32),
                       jax.ShapeDtypeStruct((N, 1, C), jnp.float32)),
            grid_spec=pltpu.PrefetchScalarGridSpec(
                num_scalar_prefetch=0,
                grid=(N,),
                in_specs=[pl.BlockSpec((1, H, W, C), lambda n: (n, 0, 0, 0)),
                          pl.BlockSpec((KW, KW * C, C), lambda n: (0, 0, 0)),
                          pl.BlockSpec((1, C), lambda n: (0, 0))],
                out_specs=(pl.BlockSpec((1, H * W, C), lambda n: (n, 0, 0)),
                           pl.BlockSpec((1, 1, C), lambda n: (n, 0, 0)),
                           pl.BlockSpec((1, 1, C), lambda n: (n, 0, 0))),
                scratch_shapes=[pltpu.VMEM((Hp, W + 2 * PAD, C),
                                           jnp.float32)]),
            compiler_params=pltpu.CompilerParams(
                dimension_semantics=("parallel",),
                vmem_limit_bytes=VMEM_LIMIT),
            cost_estimate=pl.CostEstimate(flops=flops, transcendentals=0,
                                          bytes_accessed=bytes_accessed),
        )(x_nhwc, wt, b_c)
        conv_wc = conv.reshape(N, H, WC)             # free re-view
        g_sum = ssum.reshape(N, C)                   # groups = (n,), count H*W
        g_m2 = sm2.reshape(N, C)
        cnt = float(H * W)

    # Tiny numerically-stable global stat combine + folded BN constants.
    gamma4 = jnp.tile(params["gamma"], 4)            # shared BN, all 4 branches
    beta4 = jnp.tile(params["beta"], 4)
    s, t = _bn_fold(g_sum, g_m2, cnt, gamma4, beta4)
    s_wc = jnp.tile(s, W).reshape(1, WC)             # lane-dense (w*C + c)
    t_wc = jnp.tile(t, W).reshape(1, WC)

    # ---------------- pass 2: bn + relu + residual + relu -------------------
    th = _row_tile(H)
    flops2 = 4 * N * H * WC
    bytes2 = (conv_wc.size * 2 + x_wc.size * 2 + 2 * WC * 4
              + N * H * WC * x_nchw.dtype.itemsize)
    out_wc = pl.pallas_call(
        bn_residual_kernel,
        out_shape=jax.ShapeDtypeStruct((N, H, WC), x_nchw.dtype),
        grid_spec=pltpu.PrefetchScalarGridSpec(
            num_scalar_prefetch=0,
            grid=(N, H // th),
            in_specs=[pl.BlockSpec((1, th, WC), lambda n, h: (n, h, 0)),
                      pl.BlockSpec((1, th, WC), lambda n, h: (n, h, 0)),
                      pl.BlockSpec((1, WC), lambda n, h: (0, 0)),
                      pl.BlockSpec((1, WC), lambda n, h: (0, 0))],
            out_specs=pl.BlockSpec((1, th, WC), lambda n, h: (n, h, 0))),
        compiler_params=pltpu.CompilerParams(
            dimension_semantics=("parallel", "parallel"),
            vmem_limit_bytes=VMEM_LIMIT),
        cost_estimate=pl.CostEstimate(flops=flops2, transcendentals=0,
                                      bytes_accessed=bytes2),
    )(conv_wc, x_wc, s_wc, t_wc)

    return jnp.transpose(out_wc.reshape(N, H, W, C), (0, 3, 1, 2))


# --------------------------------------------------------------------------- #
# Params / reference / demo                                                   #
# --------------------------------------------------------------------------- #
def init_params(key, in_channels):
    """Deterministic PyTorch-style (uniform +-1/sqrt(fan_in)) init."""
    D = in_channels // 4
    ks = jax.random.split(key, 8)

    def conv_w(k, kh, kw):
        bound = 1.0 / float(np.sqrt(in_channels * kh * kw))
        return jax.random.uniform(k, (D, in_channels, kh, kw), jnp.float32,
                                  -bound, bound)

    def conv_b(k, kh, kw):
        bound = 1.0 / float(np.sqrt(in_channels * kh * kw))
        return jax.random.uniform(k, (D,), jnp.float32, -bound, bound)

    return dict(
        w53=conv_w(ks[0], 5, 3), b53=conv_b(ks[1], 5, 3),
        w73=conv_w(ks[2], 7, 3), b73=conv_b(ks[3], 7, 3),
        w35=conv_w(ks[4], 3, 5), b35=conv_b(ks[5], 3, 5),
        w37=conv_w(ks[6], 3, 7), b37=conv_b(ks[7], 3, 7),
        gamma=jnp.ones((D,), jnp.float32),
        beta=jnp.zeros((D,), jnp.float32),
    )


def reference(x, p):
    """Pure-JAX f32 reference matching the PyTorch forward (training-mode BN)."""
    def conv(x, w, b, ph, pw):
        y = jax.lax.conv_general_dilated(
            x, w, (1, 1), ((ph, ph), (pw, pw)),
            dimension_numbers=('NCHW', 'OIHW', 'NCHW'))
        return y + b.reshape(1, -1, 1, 1)

    def bn_relu(y):
        mean = y.mean(axis=(0, 2, 3), keepdims=True)
        var = ((y - mean) ** 2).mean(axis=(0, 2, 3), keepdims=True)
        z = (y - mean) * jax.lax.rsqrt(var + EPS)
        z = z * p['gamma'].reshape(1, -1, 1, 1) + p['beta'].reshape(1, -1, 1, 1)
        return jnp.maximum(z, 0.0)

    o1 = bn_relu(conv(x, p['w53'], p['b53'], 2, 1))
    o2 = bn_relu(conv(x, p['w73'], p['b73'], 3, 1))
    o3 = bn_relu(conv(x, p['w35'], p['b35'], 1, 2))
    o4 = bn_relu(conv(x, p['w37'], p['b37'], 1, 3))
    out = jnp.concatenate([o1, o2, o3, o4], axis=1) + x
    return jnp.maximum(out, 0.0)


if __name__ == "__main__":
    key = jax.random.PRNGKey(0)
    kx, kp = jax.random.split(key)
    N, C, H, W = 2, 8, 16, 16            # in_channels must be divisible by 4
    x = jax.random.normal(kx, (N, C, H, W), jnp.float32)
    params = init_params(kp, C)

    run = jax.jit(inception_block)
    out = run(x, params)
    jax.block_until_ready(out)

    ref = reference(x, params)
    # bf16 MXU inputs, bf16 conv intermediate and bf16 residual stream with
    # f32 accumulation / f32 BN math -> ~1e-2-level diffs at the tails.
    np.testing.assert_allclose(np.asarray(out), np.asarray(ref),
                               rtol=2e-2, atol=3e-2)
    print("KERNEL_OK")
</pallas_src>

<mosaic_0001>
module attributes {stable_mosaic.version = 11 : i64} {
  func.func @conv_stats_wdense_kernel(%arg0: i32, %arg1: memref<1x16x128xbf16, #tpu.memory_space<vmem>>, %arg2: memref<7x128x128xbf16, #tpu.memory_space<vmem>>, %arg3: memref<1x128xf32, #tpu.memory_space<vmem>>, %arg4: memref<1x16x128xbf16, #tpu.memory_space<vmem>>, %arg5: memref<1x1x128xf32, #tpu.memory_space<vmem>>, %arg6: memref<1x1x128xf32, #tpu.memory_space<vmem>>, %arg7: memref<22x128xf32, #tpu.memory_space<vmem>>) attributes {dimension_semantics = [#tpu.dimension_semantics<parallel>], iteration_bounds = array<i64: 2>, scalar_prefetch = 0 : i64, scratch_operands = 1 : i64, tpu.core_type = #tpu.core_type<tc>, window_params = [{transform_indices = @transform_0, window_bounds = array<i64: 1, 16, 128>}, {pipeline_mode = #tpu.pipeline_mode<synchronous>, transform_indices = @transform_1, window_bounds = array<i64: 7, 128, 128>}, {pipeline_mode = #tpu.pipeline_mode<synchronous>, transform_indices = @transform_2, window_bounds = array<i64: 1, 128>}, {transform_indices = @transform_3, window_bounds = array<i64: 1, 16, 128>}, {transform_indices = @transform_4, window_bounds = array<i64: 1, 1, 128>}, {transform_indices = @transform_5, window_bounds = array<i64: 1, 1, 128>}]} {
    %cst = arith.constant 0.000000e+00 : f32
    %0 = vector.broadcast %cst : f32 to vector<22x128xf32>
    %c0 = arith.constant 0 : index
    %c0_0 = arith.constant 0 : index
    %1 = vector.load %arg7[%c0, %c0_0] : memref<22x128xf32, #tpu.memory_space<vmem>>, vector<22x128xf32>
    tpu.vector_store %arg7[%c0, %c0_0], %0 {strides = array<i32>} : memref<22x128xf32, #tpu.memory_space<vmem>>, vector<22x128xf32>,
    %c0_1 = arith.constant 0 : index
    %c0_2 = arith.constant 0 : index
    %c0_3 = arith.constant 0 : index
    %2 = vector.load %arg1[%c0_1, %c0_2, %c0_3] : memref<1x16x128xbf16, #tpu.memory_space<vmem>>, vector<1x16x128xbf16>
    %3 = vector.shape_cast %2 : vector<1x16x128xbf16> to vector<16x128xbf16>
    %4 = arith.extf %3 : vector<16x128xbf16> to vector<16x128xf32>
    %c3 = arith.constant 3 : index
    %c0_4 = arith.constant 0 : index
    %5 = vector.load %arg7[%c3, %c0_4] : memref<22x128xf32, #tpu.memory_space<vmem>>, vector<16x128xf32>
    tpu.vector_store %arg7[%c3, %c0_4], %4 {strides = array<i32>} : memref<22x128xf32, #tpu.memory_space<vmem>>, vector<16x128xf32>,
    %cst_5 = arith.constant 0.000000e+00 : f32
    %6 = vector.broadcast %cst_5 : f32 to vector<16x128xf32>
    %c0_6 = arith.constant 0 : index
    %c0_7 = arith.constant 0 : index
    %7 = vector.load %arg7[%c0_6, %c0_7] : memref<22x128xf32, #tpu.memory_space<vmem>>, vector<16x128xf32>
    %8 = arith.truncf %7 : vector<16x128xf32> to vector<16x128xbf16>
    %c0_8 = arith.constant 0 : index
    %c0_9 = arith.constant 0 : index
    %c0_10 = arith.constant 0 : index
    %9 = vector.load %arg2[%c0_8, %c0_9, %c0_10] : memref<7x128x128xbf16, #tpu.memory_space<vmem>>, vector<1x128x128xbf16>
    %10 = vector.shape_cast %9 : vector<1x128x128xbf16> to vector<128x128xbf16>
    %cst_11 = arith.constant dense<0.000000e+00> : vector<16x128xf32>
    %11 = tpu.matmul %8, %10, %cst_11 {dimension_numbers = #tpu.dot_dimension_numbers<[1], [0], [0], [1], [0, 0, 1, 1], [], []>} : vector<16x128xbf16>, vector<128x128xbf16>, vector<16x128xf32> -> vector<16x128xf32>
    %12 = arith.addf %6, %11 : vector<16x128xf32>
    %c1 = arith.constant 1 : index
    %c0_12 = arith.constant 0 : index
    %13 = vector.load %arg7[%c1, %c0_12] : memref<22x128xf32, #tpu.memory_space<vmem>>, vector<16x128xf32>
    %14 = arith.truncf %13 : vector<16x128xf32> to vector<16x128xbf16>
    %c1_13 = arith.constant 1 : index
    %c0_14 = arith.constant 0 : index
    %c0_15 = arith.constant 0 : index
    %15 = vector.load %arg2[%c1_13, %c0_14, %c0_15] : memref<7x128x128xbf16, #tpu.memory_space<vmem>>, vector<1x128x128xbf16>
    %16 = vector.shape_cast %15 : vector<1x128x128xbf16> to vector<128x128xbf16>
    %cst_16 = arith.constant dense<0.000000e+00> : vector<16x128xf32>
    %17 = tpu.matmul %14, %16, %cst_16 {dimension_numbers = #tpu.dot_dimension_numbers<[1], [0], [0], [1], [0, 0, 1, 1], [], []>} : vector<16x128xbf16>, vector<128x128xbf16>, vector<16x128xf32> -> vector<16x128xf32>
    %18 = arith.addf %12, %17 : vector<16x128xf32>
    %c2 = arith.constant 2 : index
    %c0_17 = arith.constant 0 : index
    %19 = vector.load %arg7[%c2, %c0_17] : memref<22x128xf32, #tpu.memory_space<vmem>>, vector<16x128xf32>
    %20 = arith.truncf %19 : vector<16x128xf32> to vector<16x128xbf16>
    %c2_18 = arith.constant 2 : index
    %c0_19 = arith.constant 0 : index
    %c0_20 = arith.constant 0 : index
    %21 = vector.load %arg2[%c2_18, %c0_19, %c0_20] : memref<7x128x128xbf16, #tpu.memory_space<vmem>>, vector<1x128x128xbf16>
    %22 = vector.shape_cast %21 : vector<1x128x128xbf16> to vector<128x128xbf16>
    %cst_21 = arith.constant dense<0.000000e+00> : vector<16x128xf32>
    %23 = tpu.matmul %20, %22, %cst_21 {dimension_numbers = #tpu.dot_dimension_numbers<[1], [0], [0], [1], [0, 0, 1, 1], [], []>} : vector<16x128xbf16>, vector<128x128xbf16>, vector<16x128xf32> -> vector<16x128xf32>
    %24 = arith.addf %18, %23 : vector<16x128xf32>
    %c3_22 = arith.constant 3 : index
    %c0_23 = arith.constant 0 : index
    %25 = vector.load %arg7[%c3_22, %c0_23] : memref<22x128xf32, #tpu.memory_space<vmem>>, vector<16x128xf32>
    %26 = arith.truncf %25 : vector<16x128xf32> to vector<16x128xbf16>
    %c3_24 = arith.constant 3 : index
    %c0_25 = arith.constant 0 : index
    %c0_26 = arith.constant 0 : index
    %27 = vector.load %arg2[%c3_24, %c0_25, %c0_26] : memref<7x128x128xbf16, #tpu.memory_space<vmem>>, vector<1x128x128xbf16>
    %28 = vector.shape_cast %27 : vector<1x128x128xbf16> to vector<128x128xbf16>
    %cst_27 = arith.constant dense<0.000000e+00> : vector<16x128xf32>
    %29 = tpu.matmul %26, %28, %cst_27 {dimension_numbers = #tpu.dot_dimension_numbers<[1], [0], [0], [1], [0, 0, 1, 1], [], []>} : vector<16x128xbf16>, vector<128x128xbf16>, vector<16x128xf32> -> vector<16x128xf32>
    %30 = arith.addf %24, %29 : vector<16x128xf32>
    %c4 = arith.constant 4 : index
    %c0_28 = arith.constant 0 : index
    %31 = vector.load %arg7[%c4, %c0_28] : memref<22x128xf32, #tpu.memory_space<vmem>>, vector<16x128xf32>
    %32 = arith.truncf %31 : vector<16x128xf32> to vector<16x128xbf16>
    %c4_29 = arith.constant 4 : index
    %c0_30 = arith.constant 0 : index
    %c0_31 = arith.constant 0 : index
    %33 = vector.load %arg2[%c4_29, %c0_30, %c0_31] : memref<7x128x128xbf16, #tpu.memory_space<vmem>>, vector<1x128x128xbf16>
    %34 = vector.shape_cast %33 : vector<1x128x128xbf16> to vector<128x128xbf16>
    %cst_32 = arith.constant dense<0.000000e+00> : vector<16x128xf32>
    %35 = tpu.matmul %32, %34, %cst_32 {dimension_numbers = #tpu.dot_dimension_numbers<[1], [0], [0], [1], [0, 0, 1, 1], [], []>} : vector<16x128xbf16>, vector<128x128xbf16>, vector<16x128xf32> -> vector<16x128xf32>
    %36 = arith.addf %30, %35 : vector<16x128xf32>
    %c5 = arith.constant 5 : index
    %c0_33 = arith.constant 0 : index
    %37 = vector.load %arg7[%c5, %c0_33] : memref<22x128xf32, #tpu.memory_space<vmem>>, vector<16x128xf32>
    %38 = arith.truncf %37 : vector<16x128xf32> to vector<16x128xbf16>
    %c5_34 = arith.constant 5 : index
    %c0_35 = arith.constant 0 : index
    %c0_36 = arith.constant 0 : index
    %39 = vector.load %arg2[%c5_34, %c0_35, %c0_36] : memref<7x128x128xbf16, #tpu.memory_space<vmem>>, vector<1x128x128xbf16>
    %40 = vector.shape_cast %39 : vector<1x128x128xbf16> to vector<128x128xbf16>
    %cst_37 = arith.constant dense<0.000000e+00> : vector<16x128xf32>
    %41 = tpu.matmul %38, %40, %cst_37 {dimension_numbers = #tpu.dot_dimension_numbers<[1], [0], [0], [1], [0, 0, 1, 1], [], []>} : vector<16x128xbf16>, vector<128x128xbf16>, vector<16x128xf32> -> vector<16x128xf32>
    %42 = arith.addf %36, %41 : vector<16x128xf32>
    %c6 = arith.constant 6 : index
    %c0_38 = arith.constant 0 : index
    %43 = vector.load %arg7[%c6, %c0_38] : memref<22x128xf32, #tpu.memory_space<vmem>>, vector<16x128xf32>
    %44 = arith.truncf %43 : vector<16x128xf32> to vector<16x128xbf16>
    %c6_39 = arith.constant 6 : index
    %c0_40 = arith.constant 0 : index
    %c0_41 = arith.constant 0 : index
    %45 = vector.load %arg2[%c6_39, %c0_40, %c0_41] : memref<7x128x128xbf16, #tpu.memory_space<vmem>>, vector<1x128x128xbf16>
    %46 = vector.shape_cast %45 : vector<1x128x128xbf16> to vector<128x128xbf16>
    %cst_42 = arith.constant dense<0.000000e+00> : vector<16x128xf32>
    %47 = tpu.matmul %44, %46, %cst_42 {dimension_numbers = #tpu.dot_dimension_numbers<[1], [0], [0], [1], [0, 0, 1, 1], [], []>} : vector<16x128xbf16>, vector<128x128xbf16>, vector<16x128xf32> -> vector<16x128xf32>
    %48 = arith.addf %42, %47 : vector<16x128xf32>
    %c0_43 = arith.constant 0 : index
    %c0_44 = arith.constant 0 : index
    %49 = vector.load %arg3[%c0_43, %c0_44] : memref<1x128xf32, #tpu.memory_space<vmem>>, vector<1x128xf32>
    %50 = vector.broadcast %49 : vector<1x128xf32> to vector<16x128xf32>
    %51 = arith.addf %48, %50 : vector<16x128xf32>
    %52 = arith.truncf %51 : vector<16x128xf32> to vector<16x128xbf16>
    %c0_45 = arith.constant 0 : index
    %c0_46 = arith.constant 0 : index
    %c0_47 = arith.constant 0 : index
    %53 = vector.load %arg4[%c0_45, %c0_46, %c0_47] : memref<1x16x128xbf16, #tpu.memory_space<vmem>>, vector<1x16x128xbf16>
    %54 = vector.shape_cast %53 : vector<1x16x128xbf16> to vector<16x128xbf16>
    %55 = vector.shape_cast %52 : vector<16x128xbf16> to vector<1x16x128xbf16>
    tpu.vector_store %arg4[%c0_45, %c0_46, %c0_47], %55 {strides = array<i32>} : memref<1x16x128xbf16, #tpu.memory_space<vmem>>, vector<1x16x128xbf16>,
    %cst_48 = arith.constant dense<0.000000e+00> : vector<128xf32>
    %56 = vector.multi_reduction <add>, %51, %cst_48 [0] : vector<16x128xf32> to vector<128xf32>
    %57 = vector.shape_cast %56 : vector<128xf32> to vector<1x128xf32>
    %cst_49 = arith.constant 6.250000e-02 : f32
    %58 = vector.broadcast %cst_49 : f32 to vector<1x128xf32>
    %59 = arith.mulf %57, %58 : vector<1x128xf32>
    %c0_50 = arith.constant 0 : index
    %c0_51 = arith.constant 0 : index
    %c0_52 = arith.constant 0 : index
    %60 = vector.load %arg5[%c0_50, %c0_51, %c0_52] : memref<1x1x128xf32, #tpu.memory_space<vmem>>, vector<1x1x128xf32>
    %61 = vector.shape_cast %60 : vector<1x1x128xf32> to vector<1x128xf32>
    %62 = vector.shape_cast %57 : vector<1x128xf32> to vector<1x1x128xf32>
    tpu.vector_store %arg5[%c0_50, %c0_51, %c0_52], %62 {strides = array<i32>} : memref<1x1x128xf32, #tpu.memory_space<vmem>>, vector<1x1x128xf32>,
    %63 = vector.broadcast %59 : vector<1x128xf32> to vector<16x128xf32>
    %64 = arith.subf %51, %63 : vector<16x128xf32>
    %65 = arith.mulf %64, %64 : vector<16x128xf32>
    %cst_53 = arith.constant dense<0.000000e+00> : vector<128xf32>
    %66 = vector.multi_reduction <add>, %65, %cst_53 [0] : vector<16x128xf32> to vector<128xf32>
    %67 = vector.shape_cast %66 : vector<128xf32> to vector<1x128xf32>
    %c0_54 = arith.constant 0 : index
    %c0_55 = arith.constant 0 : index
    %c0_56 = arith.constant 0 : index
    %68 = vector.load %arg6[%c0_54, %c0_55, %c0_56] : memref<1x1x128xf32, #tpu.memory_space<vmem>>, vector<1x1x128xf32>
    %69 = vector.shape_cast %68 : vector<1x1x128xf32> to vector<1x128xf32>
    %70 = vector.shape_cast %67 : vector<1x128xf32> to vector<1x1x128xf32>
    tpu.vector_store %arg6[%c0_54, %c0_55, %c0_56], %70 {strides = array<i32>} : memref<1x1x128xf32, #tpu.memory_space<vmem>>, vector<1x1x128xf32>,
    return
  }
  func.func @transform_0(%arg0: i32) -> (i32, i32, i32) {
    %c0_i32 = arith.constant 0 : i32
    %c0_i32_0 = arith.constant 0 : i32
    %c0_i32_1 = arith.constant 0 : i32
    return %arg0, %c0_i32, %c0_i32_0 : i32, i32, i32
  }
  func.func @transform_1(%arg0: i32) -> (i32, i32, i32) {
    %c0_i32 = arith.constant 0 : i32
    %c0_i32_0 = arith.constant 0 : i32
    %c0_i32_1 = arith.constant 0 : i32
    %c0_i32_2 = arith.constant 0 : i32
    return %c0_i32, %c0_i32_0, %c0_i32_1 : i32, i32, i32
  }
  func.func @transform_2(%arg0: i32) -> (i32, i32) {
    %c0_i32 = arith.constant 0 : i32
    %c0_i32_0 = arith.constant 0 : i32
    %c0_i32_1 = arith.constant 0 : i32
    return %c0_i32, %c0_i32_0 : i32, i32
  }
  func.func @transform_3(%arg0: i32) -> (i32, i32, i32) {
    %c0_i32 = arith.constant 0 : i32
    %c0_i32_0 = arith.constant 0 : i32
    %c0_i32_1 = arith.constant 0 : i32
    return %arg0, %c0_i32, %c0_i32_0 : i32, i32, i32
  }
  func.func @transform_4(%arg0: i32) -> (i32, i32, i32) {
    %c0_i32 = arith.constant 0 : i32
    %c0_i32_0 = arith.constant 0 : i32
    %c0_i32_1 = arith.constant 0 : i32
    return %arg0, %c0_i32, %c0_i32_0 : i32, i32, i32
  }
  func.func @transform_5(%arg0: i32) -> (i32, i32, i32) {
    %c0_i32 = arith.constant 0 : i32
    %c0_i32_0 = arith.constant 0 : i32
    %c0_i32_1 = arith.constant 0 : i32
    return %arg0, %c0_i32, %c0_i32_0 : i32, i32, i32
  }
}

module attributes {stable_mosaic.version = 11 : i64} {
  func.func @bn_residual_kernel(%arg0: i32, %arg1: i32, %arg2: memref<1x16x128xbf16, #tpu.memory_space<vmem>>, %arg3: memref<1x16x128xbf16, #tpu.memory_space<vmem>>, %arg4: memref<1x128xf32, #tpu.memory_space<vmem>>, %arg5: memref<1x128xf32, #tpu.memory_space<vmem>>, %arg6: memref<1x16x128xf32, #tpu.memory_space<vmem>>) attributes {dimension_semantics = [#tpu.dimension_semantics<parallel>, #tpu.dimension_semantics<parallel>], iteration_bounds = array<i64: 2, 1>, scalar_prefetch = 0 : i64, scratch_operands = 0 : i64, tpu.core_type = #tpu.core_type<tc>, window_params = [{transform_indices = @transform_0, window_bounds = array<i64: 1, 16, 128>}, {transform_indices = @transform_1, window_bounds = array<i64: 1, 16, 128>}, {pipeline_mode = #tpu.pipeline_mode<synchronous>, transform_indices = @transform_2, window_bounds = array<i64: 1, 128>}, {pipeline_mode = #tpu.pipeline_mode<synchronous>, transform_indices = @transform_3, window_bounds = array<i64: 1, 128>}, {transform_indices = @transform_4, window_bounds = array<i64: 1, 16, 128>}]} {
    %c0 = arith.constant 0 : index
    %c0_0 = arith.constant 0 : index
    %c0_1 = arith.constant 0 : index
    %0 = vector.load %arg2[%c0, %c0_0, %c0_1] : memref<1x16x128xbf16, #tpu.memory_space<vmem>>, vector<1x16x128xbf16>
    %1 = vector.shape_cast %0 : vector<1x16x128xbf16> to vector<16x128xbf16>
    %2 = arith.extf %1 : vector<16x128xbf16> to vector<16x128xf32>
    %c0_2 = arith.constant 0 : index
    %c0_3 = arith.constant 0 : index
    %3 = vector.load %arg4[%c0_2, %c0_3] : memref<1x128xf32, #tpu.memory_space<vmem>>, vector<1x128xf32>
    %4 = vector.broadcast %3 : vector<1x128xf32> to vector<16x128xf32>
    %5 = arith.mulf %2, %4 : vector<16x128xf32>
    %c0_4 = arith.constant 0 : index
    %c0_5 = arith.constant 0 : index
    %6 = vector.load %arg5[%c0_4, %c0_5] : memref<1x128xf32, #tpu.memory_space<vmem>>, vector<1x128xf32>
    %7 = vector.broadcast %6 : vector<1x128xf32> to vector<16x128xf32>
    %8 = arith.addf %5, %7 : vector<16x128xf32>
    %cst = arith.constant 0.000000e+00 : f32
    %9 = vector.broadcast %cst : f32 to vector<16x128xf32>
    %10 = arith.maximumf %8, %9 : vector<16x128xf32>
    %c0_6 = arith.constant 0 : index
    %c0_7 = arith.constant 0 : index
    %c0_8 = arith.constant 0 : index
    %11 = vector.load %arg3[%c0_6, %c0_7, %c0_8] : memref<1x16x128xbf16, #tpu.memory_space<vmem>>, vector<1x16x128xbf16>
    %12 = vector.shape_cast %11 : vector<1x16x128xbf16> to vector<16x128xbf16>
    %13 = arith.extf %12 : vector<16x128xbf16> to vector<16x128xf32>
    %14 = arith.addf %10, %13 : vector<16x128xf32>
    %cst_9 = arith.constant 0.000000e+00 : f32
    %15 = vector.broadcast %cst_9 : f32 to vector<16x128xf32>
    %16 = arith.maximumf %14, %15 : vector<16x128xf32>
    %c0_10 = arith.constant 0 : index
    %c0_11 = arith.constant 0 : index
    %c0_12 = arith.constant 0 : index
    %17 = vector.load %arg6[%c0_10, %c0_11, %c0_12] : memref<1x16x128xf32, #tpu.memory_space<vmem>>, vector<1x16x128xf32>
    %18 = vector.shape_cast %17 : vector<1x16x128xf32> to vector<16x128xf32>
    %19 = vector.shape_cast %16 : vector<16x128xf32> to vector<1x16x128xf32>
    tpu.vector_store %arg6[%c0_10, %c0_11, %c0_12], %19 {strides = array<i32>} : memref<1x16x128xf32, #tpu.memory_space<vmem>>, vector<1x16x128xf32>,
    return
  }
  func.func @transform_0(%arg0: i32, %arg1: i32) -> (i32, i32, i32) {
    %c0_i32 = arith.constant 0 : i32
    %c0_i32_0 = arith.constant 0 : i32
    return %arg0, %arg1, %c0_i32 : i32, i32, i32
  }
  func.func @transform_1(%arg0: i32, %arg1: i32) -> (i32, i32, i32) {
    %c0_i32 = arith.constant 0 : i32
    %c0_i32_0 = arith.constant 0 : i32
    return %arg0, %arg1, %c0_i32 : i32, i32, i32
  }
  func.func @transform_2(%arg0: i32, %arg1: i32) -> (i32, i32) {
    %c0_i32 = arith.constant 0 : i32
    %c0_i32_0 = arith.constant 0 : i32
    %c0_i32_1 = arith.constant 0 : i32
    return %c0_i32, %c0_i32_0 : i32, i32
  }
  func.func @transform_3(%arg0: i32, %arg1: i32) -> (i32, i32) {
    %c0_i32 = arith.constant 0 : i32
    %c0_i32_0 = arith.constant 0 : i32
    %c0_i32_1 = arith.constant 0 : i32
    return %c0_i32, %c0_i32_0 : i32, i32
  }
  func.func @transform_4(%arg0: i32, %arg1: i32) -> (i32, i32, i32) {
    %c0_i32 = arith.constant 0 : i32
    %c0_i32_0 = arith.constant 0 : i32
    return %arg0, %arg1, %c0_i32 : i32, i32, i32
  }
}

</mosaic_0001>

<llo_original>
// kernel: tile.28
$region0: #{tile.28}
  #allocation0 [shape = 's32[1]{0}', space=sflag, size = 0x4, scoped, tag = 'scoped memory for tile.28']
  %s0 = inlined_call_operand.vmem [shape: f32[8], index: 0, kind: input, shape index: {}]
  %s1 = inlined_call_operand.vmem [shape: f32[16,8], index: 1, kind: output, shape index: {}]
  // Predicated region
  $region2: #{tile.28} parent=0 // pred_check
    _
  $region3: #{tile.28} parent=0 // pred_check_branch
    %3 = sbr.rel (0) target = $region5
  $region4: #{tile.28} parent=0 // pred_region
    _
  $region5: #{tile.28} parent=0 // pred_fallthru
    _
  %v4 = vld [vmem:[%s0] ss:$0 sm:$0xff]
  %5 = vst [vmem:[%s1] sm:$0xff] %v4
  %s6 = scalar_lea.vmem %s1, 8
  %7 = vst [vmem:[%s6] sm:$0xff] %v4

// kernel: tile.29
$region0: #{tile.29}
  %s0 = inlined_call_operand.vmem [shape: f32[16,8], index: 0, kind: input, shape index: {}]
  %s1 = inlined_call_operand.vmem [shape: f32[1,128], index: 1, kind: output, shape index: {}]
  $region1: #{tile.29} parent=0
    #allocation0 [shape = 'u8[4096]{0}', space=vmem, size = 0x1000, scoped, tag = 'scoped mem for output reshape']
    %v2 = vld [vmem:[%s0] sm:$0x1]
    %vm3 = vcmask 64512
    %4 = vst.msk [vmem:[#allocation0] sm:$0x1] %vm3, %v2
    %s5 = scalar_lea.vmem %s0, 15
    %v6 = vld [vmem:[%s5] sm:$0x1]
    %7 = vrot.lane.b32.xlu0 %v6, 120
    %v8 = vpop.permute.xlu0 %7
    %vm9 = vcmask 1048512
    %10 = vst.msk [vmem:[#allocation0] sm:$0x1] %vm9, %v8
    %s11 = scalar_lea.vmem %s0, 14
    %v12 = vld [vmem:[%s11] sm:$0x1]
    %13 = vrot.lane.b32.xlu0 %v12, 112
    %v14 = vpop.permute.xlu0 %13
    %vm15 = vcmask 982912
    %16 = vst.msk [vmem:[#allocation0] sm:$0x1] %vm15, %v14
    %s17 = scalar_lea.vmem %s0, 13
    %v18 = vld [vmem:[%s17] sm:$0x1]
    %19 = vrot.lane.b32.xlu0 %v18, 104
    %v20 = vpop.permute.xlu0 %19
    %vm21 = vcmask 917312
    %22 = vst.msk [vmem:[#allocation0] sm:$0x1] %vm21, %v20
    %s23 = scalar_lea.vmem %s0, 12
    %v24 = vld [vmem:[%s23] sm:$0x1]
    %25 = vrot.lane.b32.xlu0 %v24, 96
    %v26 = vpop.permute.xlu0 %25
    %vm27 = vcmask 851712
    %28 = vst.msk [vmem:[#allocation0] sm:$0x1] %vm27, %v26
    %s29 = scalar_lea.vmem %s0, 11
    %v30 = vld [vmem:[%s29] sm:$0x1]
    %31 = vrot.lane.b32.xlu0 %v30, 88
    %v32 = vpop.permute.xlu0 %31
    %vm33 = vcmask 786112
    %34 = vst.msk [vmem:[#allocation0] sm:$0x1] %vm33, %v32
    %s35 = scalar_lea.vmem %s0, 10
    %v36 = vld [vmem:[%s35] sm:$0x1]
    %37 = vrot.lane.b32.xlu0 %v36, 80
    %v38 = vpop.permute.xlu0 %37
    %vm39 = vcmask 720512
    %40 = vst.msk [vmem:[#allocation0] sm:$0x1] %vm39, %v38
    %s41 = scalar_lea.vmem %s0, 9
    %v42 = vld [vmem:[%s41] sm:$0x1]
    %43 = vrot.lane.b32.xlu0 %v42, 72
    %v44 = vpop.permute.xlu0 %43
    %vm45 = vcmask 654912
    %46 = vst.msk [vmem:[#allocation0] sm:$0x1] %vm45, %v44
    %s47 = scalar_lea.vmem %s0, 8
    %v48 = vld [vmem:[%s47] sm:$0x1]
    %49 = vrot.lane.b32.xlu0 %v48, 64
    %v50 = vpop.permute.xlu0 %49
    %vm51 = vcmask 589312
    %52 = vst.msk [vmem:[#allocation0] sm:$0x1] %vm51, %v50
    %s53 = scalar_lea.vmem %s0, 7
    %v54 = vld [vmem:[%s53] sm:$0x1]
    %55 = vrot.lane.b32.xlu0 %v54, 56
    %v56 = vpop.permute.xlu0 %55
    %vm57 = vcmask 523712
    %58 = vst.msk [vmem:[#allocation0] sm:$0x1] %vm57, %v56
    %s59 = scalar_lea.vmem %s0, 6
    %v60 = vld [vmem:[%s59] sm:$0x1]
    %61 = vrot.lane.b32.xlu0 %v60, 48
    %v62 = vpop.permute.xlu0 %61
    %vm63 = vcmask 458112
    %64 = vst.msk [vmem:[#allocation0] sm:$0x1] %vm63, %v62
    %s65 = scalar_lea.vmem %s0, 5
    %v66 = vld [vmem:[%s65] sm:$0x1]
    %67 = vrot.lane.b32.xlu0 %v66, 40
    %v68 = vpop.permute.xlu0 %67
    %vm69 = vcmask 392512
    %70 = vst.msk [vmem:[#allocation0] sm:$0x1] %vm69, %v68
    %s71 = scalar_lea.vmem %s0, 4
    %v72 = vld [vmem:[%s71] sm:$0x1]
    %73 = vrot.lane.b32.xlu0 %v72, 32
    %v74 = vpop.permute.xlu0 %73
    %vm75 = vcmask 326912
    %76 = vst.msk [vmem:[#allocation0] sm:$0x1] %vm75, %v74
    %s77 = scalar_lea.vmem %s0, 3
    %v78 = vld [vmem:[%s77] sm:$0x1]
    %79 = vrot.lane.b32.xlu0 %v78, 24
    %v80 = vpop.permute.xlu0 %79
    %vm81 = vcmask 261312
    %82 = vst.msk [vmem:[#allocation0] sm:$0x1] %vm81, %v80
    %s83 = scalar_lea.vmem %s0, 2
    %v84 = vld [vmem:[%s83] sm:$0x1]
    %85 = vrot.lane.b32.xlu0 %v84, 16
    %v86 = vpop.permute.xlu0 %85
    %vm87 = vcmask 195712
    %88 = vst.msk [vmem:[#allocation0] sm:$0x1] %vm87, %v86
    %s89 = scalar_lea.vmem %s0, 1
    %v90 = vld [vmem:[%s89] sm:$0x1]
    %91 = vrot.lane.b32.xlu0 %v90, 8
    %v92 = vpop.permute.xlu0 %91
    %vm93 = vcmask 130112
    %94 = vst.msk [vmem:[#allocation0] sm:$0x1] %vm93, %v92
    %s96 = sshllo.u32 0, 1
    %v98 = vld [vmem:[#allocation0] sm:%s96]
    %s99 = sshllo.u32 0, 1
    %100 = vst [vmem:[%s1] sm:%s99] %v98

// kernel: inception_block.2
$region0: #{inception_block.2}
  #allocation0 [shape = 'u32[]', space=smem, size = 0x4, offset = 0x4, fixed_abs, tag = 'smem constant byte address 0x4 - core index']
  #allocation1 [shape = 'u32[144,128]{1,0:T(1,128)}', space=vmem, size = 0x12000, scoped, tag = 'internal scratch']
  #allocation2 [shape = 'f32[22,128]{1,0:T(8,128)}', space=vmem, size = 0x3000, scoped, tag = 'scratch operand']
  %s0 = inlined_call_operand.vmem [shape: bf16[2,16,128], index: 0, kind: input, shape index: {}]
  %s1 = inlined_call_operand.vmem [shape: bf16[7,128,128], index: 1, kind: input, shape index: {}]
  %s2 = inlined_call_operand.vmem [shape: f32[1,128], index: 2, kind: input, shape index: {}]
  %s3 = inlined_call_operand.vmem [shape: bf16[2,16,128], index: 3, kind: output, shape index: {0}]
  %s4 = inlined_call_operand.vmem [shape: f32[2,1,128], index: 4, kind: output, shape index: {1}]
  %s5 = inlined_call_operand.vmem [shape: f32[2,1,128], index: 5, kind: output, shape index: {2}]
  %6 = xla_tuple %s3, %s4, %s5
  %s7 = sld [smem:[#allocation0]]
  $region61: #{inception_block.2} parent=0
    _
  %s9 = ssub.s32 1, %s7
  %s10 = scalar_select 0, %s9, %s7
  loop: start=0, step=1, limit=4
  $region2: #{inception_block.2} parent=0 // loop_pre_header
    _
  $region3: #{inception_block.2} parent=0 // loop_header
    %s12 = sphi 0, %s16
    %p13 = scmp.ge.s32.totalorder %s12, 4
    %s22 = sphi 0, %s24
    %s25 = sphi 0, %s22
    %s26 = sphi 0, %s25
    %s42 = sphi 0, %s26
    %s46 = sphi 0, %s46
    %s48 = sphi 0, %s46
    %s49 = sphi 0, %s48
    %s63 = sphi 0, %s49
    %s67 = sphi 0, %s67
    %s69 = sphi 0, %s67
    %s70 = sphi 0, %s69
    %s84 = sphi 0, %s70
    %s90 = sphi 0, %s92
    %s93 = sphi 0, %s90
    %s94 = sphi 0, %s93
    %s110 = sphi 0, %s94
    %s116 = sphi 0, %s118
    %s119 = sphi 0, %s116
    %s120 = sphi 0, %s119
    %s136 = sphi 0, %s120
    %s142 = sphi 0, %s144
    %s145 = sphi 0, %s142
    %s146 = sphi 0, %s145
    %s162 = sphi 0, %s146
  $region4: #{inception_block.2} parent=0 // loop_header_branch
    %15 = sbr.rel (%p13) target = $region8
  $region5: #{inception_block.2} parent=0 // loop_body
    %s17 = ssub.s32 %s12, 1
    %s18 = ssub.s32 %s12, 2
    %s19 = sadd.s32 %s12, 1
    %s20 = ssub.s32 %s12, %s19
    %p21 = scmp.eq.s32.totalorder %s20, 0
    %s23 = sadd.s32 %s22, 1
    %s24 = scalar_select %p21, %s22, %s23
    %p27 = pneg %p21
    %p28 = scmp.eq.s32.totalorder %s12, 1
    %p29 = por %p27, %p28
    %p30 = scmp.ne.s32.totalorder %s22, %s25
    %p31 = scmp.eq.s32.totalorder %s12, 0
    %p32 = por %p30, %p31
    %p33 = scmp.ne.s32.totalorder %s22, %s25
    %p34 = scmp.eq.s32.totalorder %s17, 1
    %p35 = por %p33, %p34
    %p36 = scmp.ne.s32.totalorder %s25, %s26
    %p37 = scmp.eq.s32.totalorder %s17, 0
    %p38 = por %p36, %p37
    %p39 = scmp.ne.s32.totalorder %s25, %s26
    %p40 = scmp.eq.s32.totalorder %s18, 1
    %p41 = por %p39, %p40
    %p43 = scmp.ne.s32.totalorder %s26, %s42
    %p44 = scmp.eq.s32.totalorder %s18, 0
    %p45 = por %p43, %p44
    %s47 = sadd.s32 %s46, 1
    %p50 = scmp.eq.s32.totalorder %s12, 1
    %p51 = scmp.ne.s32.totalorder %s46, %s48
    %p52 = scmp.eq.s32.totalorder %s12, 0
    %p53 = por %p51, %p52
    %p54 = scmp.ne.s32.totalorder %s46, %s48
    %p55 = scmp.eq.s32.totalorder %s17, 1
    %p56 = por %p54, %p55
    %p57 = scmp.ne.s32.totalorder %s48, %s49
    %p58 = scmp.eq.s32.totalorder %s17, 0
    %p59 = por %p57, %p58
    %p60 = scmp.ne.s32.totalorder %s48, %s49
    %p61 = scmp.eq.s32.totalorder %s18, 1
    %p62 = por %p60, %p61
    %p64 = scmp.ne.s32.totalorder %s49, %s63
    %p65 = scmp.eq.s32.totalorder %s18, 0
    %p66 = por %p64, %p65
    %s68 = sadd.s32 %s67, 1
    %p71 = scmp.eq.s32.totalorder %s12, 1
    %p72 = scmp.ne.s32.totalorder %s67, %s69
    %p73 = scmp.eq.s32.totalorder %s12, 0
    %p74 = por %p72, %p73
    %p75 = scmp.ne.s32.totalorder %s67, %s69
    %p76 = scmp.eq.s32.totalorder %s17, 1
    %p77 = por %p75, %p76
    %p78 = scmp.ne.s32.totalorder %s69, %s70
    %p79 = scmp.eq.s32.totalorder %s17, 0
    %p80 = por %p78, %p79
    %p81 = scmp.ne.s32.totalorder %s69, %s70
    %p82 = scmp.eq.s32.totalorder %s18, 1
    %p83 = por %p81, %p82
    %p85 = scmp.ne.s32.totalorder %s70, %s84
    %p86 = scmp.eq.s32.totalorder %s18, 0
    %p87 = por %p85, %p86
    %s88 = ssub.s32 %s12, %s19
    %p89 = scmp.eq.s32.totalorder %s88, 0
    %s91 = sadd.s32 %s90, 1
    %s92 = scalar_select %p89, %s90, %s91
    %p95 = pneg %p89
    %p96 = scmp.eq.s32.totalorder %s12, 1
    %p97 = por %p95, %p96
    %p98 = scmp.ne.s32.totalorder %s90, %s93
    %p99 = scmp.eq.s32.totalorder %s12, 0
    %p100 = por %p98, %p99
    %p101 = scmp.ne.s32.totalorder %s90, %s93
    %p102 = scmp.eq.s32.totalorder %s17, 1
    %p103 = por %p101, %p102
    %p104 = scmp.ne.s32.totalorder %s93, %s94
    %p105 = scmp.eq.s32.totalorder %s17, 0
    %p106 = por %p104, %p105
    %p107 = scmp.ne.s32.totalorder %s93, %s94
    %p108 = scmp.eq.s32.totalorder %s18, 1
    %p109 = por %p107, %p108
    %p111 = scmp.ne.s32.totalorder %s94, %s110
    %p112 = scmp.eq.s32.totalorder %s18, 0
    %p113 = por %p111, %p112
    %s114 = ssub.s32 %s12, %s19
    %p115 = scmp.eq.s32.totalorder %s114, 0
    %s117 = sadd.s32 %s116, 1
    %s118 = scalar_select %p115, %s116, %s117
    %p121 = pneg %p115
    %p122 = scmp.eq.s32.totalorder %s12, 1
    %p123 = por %p121, %p122
    %p124 = scmp.ne.s32.totalorder %s116, %s119
    %p125 = scmp.eq.s32.totalorder %s12, 0
    %p126 = por %p124, %p125
    %p127 = scmp.ne.s32.totalorder %s116, %s119
    %p128 = scmp.eq.s32.totalorder %s17, 1
    %p129 = por %p127, %p128
    %p130 = scmp.ne.s32.totalorder %s119, %s120
    %p131 = scmp.eq.s32.totalorder %s17, 0
    %p132 = por %p130, %p131
    %p133 = scmp.ne.s32.totalorder %s119, %s120
    %p134 = scmp.eq.s32.totalorder %s18, 1
    %p135 = por %p133, %p134
    %p137 = scmp.ne.s32.totalorder %s120, %s136
    %p138 = scmp.eq.s32.totalorder %s18, 0
    %p139 = por %p137, %p138
    %s140 = ssub.s32 %s12, %s19
    %p141 = scmp.eq.s32.totalorder %s140, 0
    %s143 = sadd.s32 %s142, 1
    %s144 = scalar_select %p141, %s142, %s143
    %p147 = pneg %p141
    %p148 = scmp.eq.s32.totalorder %s12, 1
    %p149 = por %p147, %p148
    %p150 = scmp.ne.s32.totalorder %s142, %s145
    %p151 = scmp.eq.s32.totalorder %s12, 0
    %p152 = por %p150, %p151
    %p153 = scmp.ne.s32.totalorder %s142, %s145
    %p154 = scmp.eq.s32.totalorder %s17, 1
    %p155 = por %p153, %p154
    %p156 = scmp.ne.s32.totalorder %s145, %s146
    %p157 = scmp.eq.s32.totalorder %s17, 0
    %p158 = por %p156, %p157
    %p159 = scmp.ne.s32.totalorder %s145, %s146
    %p160 = scmp.eq.s32.totalorder %s18, 1
    %p161 = por %p159, %p160
    %p163 = scmp.ne.s32.totalorder %s146, %s162
    %p164 = scmp.eq.s32.totalorder %s18, 0
    %p165 = por %p163, %p164
    %p166 = scmp.le.s32.totalorder 1, %s12
    %p167 = scmp.lt.s32.totalorder %s12, 3
    %p168 = pnand %p166, %p167
    %p169 = pneg %p168
    // Predicated region
    $region9: #{inception_block.2} parent=5 // pred_check
      _
    $region10: #{inception_block.2} parent=5 // pred_check_branch
      %171 = sbr.rel (%p168) target = $region12
    $region11: #{inception_block.2} parent=5 // pred_region
      %s172 = ssub.s32 %s12, 1
      // Predicated region
      $region13: #{inception_block.2} parent=11 // pred_check
        %p173 = pneg %p59
      $region14: #{inception_block.2} parent=11 // pred_check_branch
        %175 = sbr.rel (%p173) target = $region16
      $region15: #{inception_block.2} parent=11 // pred_region
        _
      $region16: #{inception_block.2} parent=11 // pred_fallthru
        _
      // Predicated region
      $region17: #{inception_block.2} parent=11 // pred_check
        %p176 = pneg %p80
      $region18: #{inception_block.2} parent=11 // pred_check_branch
        %178 = sbr.rel (%p176) target = $region20
      $region19: #{inception_block.2} parent=11 // pred_region
        _
      $region20: #{inception_block.2} parent=11 // pred_fallthru
        _
    $region12: #{inception_block.2} parent=5 // pred_fallthru
      _
    %p179 = scmp.lt.s32.totalorder %s12, 2
    // Predicated region
    $region21: #{inception_block.2} parent=5 // pred_check
      %p180 = pneg %p179
    $region22: #{inception_block.2} parent=5 // pred_check_branch
      %182 = sbr.rel (%p180) target = $region24
    $region23: #{inception_block.2} parent=5 // pred_region
      // Predicated region
      $region25: #{inception_block.2} parent=23 // pred_check
        %p183 = pneg %p32
      $region26: #{inception_block.2} parent=23 // pred_check_branch
        %185 = sbr.rel (%p183) target = $region28
      $region27: #{inception_block.2} parent=23 // pred_region
        %p186 = scmp.lt.s32.totalorder %s12, 1
        %s187 = scalar_select %p186, %s12, 1
        %s188 = smul.addr %s187, 2
        %s189 = smul.addr %s188, 4
        %s190 = scalar_lea.vmem %s0, %s189
      $region28: #{inception_block.2} parent=23 // pred_fallthru
        _
    $region24: #{inception_block.2} parent=5 // pred_fallthru
      _
    %p191 = scmp.le.s32.totalorder 1, %s12
    %p192 = scmp.lt.s32.totalorder %s12, 3
    %p193 = pnand %p191, %p192
    %p194 = pneg %p193
    // Predicated region
    $region29: #{inception_block.2} parent=5 // pred_check
      _
    $region30: #{inception_block.2} parent=5 // pred_check_branch
      %196 = sbr.rel (%p193) target = $region32
    $region31: #{inception_block.2} parent=5 // pred_region
      %s197 = ssub.s32 %s12, 1
      %p198 = scmp.lt.s32.totalorder %s17, 1
      %s199 = scalar_select %p198, %s17, 1
      %s200 = smul.addr %s199, 2
      %s201 = smul.addr %s200, 4
      %s202 = scalar_lea.vmem %s0, %s201
      %p203 = pneg %p38
      %p204 = pneg %p35
      %p205 = pneg %p59
      %p206 = pneg %p56
      %p207 = pneg %p80
      %p208 = pneg %p77
      %p209 = pneg %p106
      %p210 = pneg %p103
      %p211 = scmp.lt.s32.totalorder %s17, 1
      %s212 = scalar_select %p211, %s17, 1
      %s213 = smul.addr %s212, 2
      %s214 = smul.addr %s213, 4
      %s215 = scalar_lea.vmem %s3, %s214
      %p216 = pneg %p132
      %p217 = pneg %p129
      %p218 = scmp.lt.s32.totalorder %s17, 1
      %s219 = scalar_select %p218, %s17, 1
      %s220 = scalar_lea.vmem %s4, %s219
      %p221 = pneg %p158
      %p222 = pneg %p155
      %p223 = scmp.lt.s32.totalorder %s17, 1
      %s224 = scalar_select %p223, %s17, 1
      %s225 = scalar_lea.vmem %s5, %s224
      %p226 = scmp.lt.s32.totalorder %s17, 1
      %s227 = scalar_select %p226, %s17, 1
      %s228 = smul.addr %s227, 2
      %s229 = smul.addr %s228, 4
      %s230 = scalar_lea.vmem %s0, %s229
      %p231 = scmp.lt.s32.totalorder %s17, 1
      %s232 = scalar_select %p231, %s17, 1
      %s233 = smul.addr %s232, 2
      %s234 = smul.addr %s233, 4
      %s235 = scalar_lea.vmem %s3, %s234
      %p236 = scmp.lt.s32.totalorder %s17, 1
      %s237 = scalar_select %p236, %s17, 1
      %s238 = scalar_lea.vmem %s4, %s237
      %p239 = scmp.lt.s32.totalorder %s17, 1
      %s240 = scalar_select %p239, %s17, 1
      %s241 = scalar_lea.vmem %s5, %s240
      %243 = vst [vmem:[#allocation2] sm:$0xff] 0.0
      %244 = vst [vmem:[#allocation2 + $0x8] sm:$0xff] 0.0
      %245 = vst [vmem:[#allocation2 + $0x10] sm:$0x3f] 0.0
      %v246 = vld [vmem:[%s230] sm:$0xf]
      %v247 = vld [vmem:[%s230 + $0x4] sm:$0xf]
      %v248 = vunpack.c.l.bf16 %v246
      %v249 = vunpack.c.l.bf16 %v247
      %250 = vst [vmem:[#allocation2 + $0x3] sm:$0xff] %v248
      %251 = vst [vmem:[#allocation2 + $0xb] sm:$0xff] %v249
      %v252 = vld [vmem:[#allocation2] sm:$0xff]
      %v253 = vld [vmem:[#allocation2 + $0x8] sm:$0xff]
      %v254 = vpack.c.bf16 %v253, %v252
      %v255 = vld [vmem:[%s1] sm:$0xf]
      %v256 = vld [vmem:[%s1 + $0x4] sm:$0xf]
      %v257 = vld [vmem:[%s1 + $0x8] sm:$0xf]
      %v258 = vld [vmem:[%s1 + $0xc] sm:$0xf]
      %v259 = vld [vmem:[%s1 + $0x10] sm:$0xf]
      %v260 = vld [vmem:[%s1 + $0x14] sm:$0xf]
      %v261 = vld [vmem:[%s1 + $0x18] sm:$0xf]
      %v262 = vld [vmem:[%s1 + $0x1c] sm:$0xf]
      %v263 = vld [vmem:[%s1 + $0x20] sm:$0xf]
      %v264 = vld [vmem:[%s1 + $0x24] sm:$0xf]
      %v265 = vld [vmem:[%s1 + $0x28] sm:$0xf]
      %v266 = vld [vmem:[%s1 + $0x2c] sm:$0xf]
      %v267 = vld [vmem:[%s1 + $0x30] sm:$0xf]
      %v268 = vld [vmem:[%s1 + $0x34] sm:$0xf]
      %v269 = vld [vmem:[%s1 + $0x38] sm:$0xf]
      %v270 = vld [vmem:[%s1 + $0x3c] sm:$0xf]
      %v271 = vld [vmem:[#allocation2 + $0x1] sm:$0xff]
      %v272 = vld [vmem:[#allocation2 + $0x9] sm:$0xff]
      %v273 = vpack.c.bf16 %v272, %v271
      %s274 = scalar_lea.vmem %s1, 64
      %v275 = vld [vmem:[%s274] sm:$0xf]
      %v276 = vld [vmem:[%s274 + $0x4] sm:$0xf]
      %v277 = vld [vmem:[%s274 + $0x8] sm:$0xf]
      %v278 = vld [vmem:[%s274 + $0xc] sm:$0xf]
      %v279 = vld [vmem:[%s274 + $0x10] sm:$0xf]
      %v280 = vld [vmem:[%s274 + $0x14] sm:$0xf]
      %v281 = vld [vmem:[%s274 + $0x18] sm:$0xf]
      %v282 = vld [vmem:[%s274 + $0x1c] sm:$0xf]
      %v283 = vld [vmem:[%s274 + $0x20] sm:$0xf]
      %v284 = vld [vmem:[%s274 + $0x24] sm:$0xf]
      %v285 = vld [vmem:[%s274 + $0x28] sm:$0xf]
      %v286 = vld [vmem:[%s274 + $0x2c] sm:$0xf]
      %v287 = vld [vmem:[%s274 + $0x30] sm:$0xf]
      %v288 = vld [vmem:[%s274 + $0x34] sm:$0xf]
      %v289 = vld [vmem:[%s274 + $0x38] sm:$0xf]
      %v290 = vld [vmem:[%s274 + $0x3c] sm:$0xf]
      %v307 = vunpack.c.l.b16 %v275
      %v308 = vunpack.c.l.b16 %v276
      %v309 = vunpack.c.l.b16 %v277
      %v310 = vunpack.c.l.b16 %v278
      %v311 = vunpack.c.l.b16 %v279
      %v312 = vunpack.c.l.b16 %v280
      %v313 = vunpack.c.l.b16 %v281
      %v314 = vunpack.c.l.b16 %v282
      %v315 = vunpack.c.l.b16 %v283
      %v316 = vunpack.c.l.b16 %v284
      %v317 = vunpack.c.l.b16 %v285
      %v318 = vunpack.c.l.b16 %v286
      %v319 = vunpack.c.l.b16 %v287
      %v320 = vunpack.c.l.b16 %v288
      %v321 = vunpack.c.l.b16 %v289
      %v322 = vunpack.c.l.b16 %v290
      %v323 = vpack.c.b16 %v308, %v307
      %v324 = vpack.c.b16 %v310, %v309
      %v325 = vpack.c.b16 %v312, %v311
      %v326 = vpack.c.b16 %v314, %v313
      %v327 = vpack.c.b16 %v316, %v315
      %v328 = vpack.c.b16 %v318, %v317
      %v329 = vpack.c.b16 %v320, %v319
      %v330 = vpack.c.b16 %v322, %v321
      %339 = vmatprep.subr.bf16.mxu0 0
      %340 = vmatpush1.bf16.msra.mxu0 %v323
      %341 = vmatprep.subr.bf16.mxu0 0
      %342 = vmatpush1.bf16.msra.mxu0 %v324
      %343 = vmatprep.subr.bf16.mxu0 0
      %344 = vmatpush1.bf16.msra.mxu0 %v325
      %345 = vmatprep.subr.bf16.mxu0 0
      %346 = vmatpush1.bf16.msra.mxu0 %v326
      %347 = vmatprep.subr.bf16.mxu0 0
      %348 = vmatpush1.bf16.msra.mxu0 %v327
      %349 = vmatprep.subr.bf16.mxu0 0
      %350 = vmatpush1.bf16.msra.mxu0 %v328
      %351 = vmatprep.subr.bf16.mxu0 0
      %352 = vmatpush1.bf16.msra.mxu0 %v329
      %353 = vmatprep.subr.bf16.mxu0 0
      %354 = vmatpush1.bf16.msra.mxu0 %v330
      %355 = vmatprep.subr.bf16.mxu0 0
      %356 = vmatpush1.bf16.msra.mxu0 0
      %357 = vmatprep.subr.bf16.mxu0 0
      %358 = vmatpush1.bf16.msra.mxu0 0
      %359 = vmatprep.subr.bf16.mxu0 0
      %360 = vmatpush1.bf16.msra.mxu0 0
      %361 = vmatprep.subr.bf16.mxu0 0
      %362 = vmatpush1.bf16.msra.mxu0 0
      %363 = vmatprep.subr.bf16.mxu0 0
      %364 = vmatpush1.bf16.msra.mxu0 0
      %365 = vmatprep.subr.bf16.mxu0 0
      %366 = vmatpush1.bf16.msra.mxu0 0
      %367 = vmatprep.subr.bf16.mxu0 0
      %368 = vmatpush1.bf16.msra.mxu0 0
      %369 = vmatprep.subr.bf16.mxu0 0
      %370 = vmatpush1.bf16.msra.mxu0 0
      %371 = vmatprep.mubr.bf16.mxu0 0
      %372 = vmatmul.mubr.bf16.gmra.mrb[0].mxu0 %v273
      %v373 = vpop.f32.mrb[0].mxu0
      %v374 = vadd.f32 0.0, %v373
      %v375 = vpop.f32.mrb[0].mxu0
      %v376 = vpop.f32.mrb[0].mxu0
      %v377 = vadd.f32 0.0, %v376
      %v378 = vpop.f32.mrb[0].mxu0
      %379 = vdwg.mxu0
      %v396 = vunpack.c.l.b16 %v255
      %v397 = vunpack.c.l.b16 %v256
      %v398 = vunpack.c.l.b16 %v257
      %v399 = vunpack.c.l.b16 %v258
      %v400 = vunpack.c.l.b16 %v259
      %v401 = vunpack.c.l.b16 %v260
      %v402 = vunpack.c.l.b16 %v261
      %v403 = vunpack.c.l.b16 %v262
      %v404 = vunpack.c.l.b16 %v263
      %v405 = vunpack.c.l.b16 %v264
      %v406 = vunpack.c.l.b16 %v265
      %v407 = vunpack.c.l.b16 %v266
      %v408 = vunpack.c.l.b16 %v267
      %v409 = vunpack.c.l.b16 %v268
      %v410 = vunpack.c.l.b16 %v269
      %v411 = vunpack.c.l.b16 %v270
      %v412 = vpack.c.b16 %v397, %v396
      %v413 = vpack.c.b16 %v399, %v398
      %v414 = vpack.c.b16 %v401, %v400
      %v415 = vpack.c.b16 %v403, %v402
      %v416 = vpack.c.b16 %v405, %v404
      %v417 = vpack.c.b16 %v407, %v406
      %v418 = vpack.c.b16 %v409, %v408
      %v419 = vpack.c.b16 %v411, %v410
      %428 = vmatprep.subr.bf16.mxu0 0
      %429 = vmatpush1.bf16.msra.mxu0 %v412
      %430 = vmatprep.subr.bf16.mxu0 0
      %431 = vmatpush1.bf16.msra.mxu0 %v413
      %432 = vmatprep.subr.bf16.mxu0 0
      %433 = vmatpush1.bf16.msra.mxu0 %v414
      %434 = vmatprep.subr.bf16.mxu0 0
      %435 = vmatpush1.bf16.msra.mxu0 %v415
      %436 = vmatprep.subr.bf16.mxu0 0
      %437 = vmatpush1.bf16.msra.mxu0 %v416
      %438 = vmatprep.subr.bf16.mxu0 0
      %439 = vmatpush1.bf16.msra.mxu0 %v417
      %440 = vmatprep.subr.bf16.mxu0 0
      %441 = vmatpush1.bf16.msra.mxu0 %v418
      %442 = vmatprep.subr.bf16.mxu0 0
      %443 = vmatpush1.bf16.msra.mxu0 %v419
      %444 = vmatprep.subr.bf16.mxu0 0
      %445 = vmatpush1.bf16.msra.mxu0 0
      %446 = vmatprep.subr.bf16.mxu0 0
      %447 = vmatpush1.bf16.msra.mxu0 0
      %448 = vmatprep.subr.bf16.mxu0 0
      %449 = vmatpush1.bf16.msra.mxu0 0
      %450 = vmatprep.subr.bf16.mxu0 0
      %451 = vmatpush1.bf16.msra.mxu0 0
      %452 = vmatprep.subr.bf16.mxu0 0
      %453 = vmatpush1.bf16.msra.mxu0 0
      %454 = vmatprep.subr.bf16.mxu0 0
      %455 = vmatpush1.bf16.msra.mxu0 0
      %456 = vmatprep.subr.bf16.mxu0 0
      %457 = vmatpush1.bf16.msra.mxu0 0
      %458 = vmatprep.subr.bf16.mxu0 0
      %459 = vmatpush1.bf16.msra.mxu0 0
      %460 = vmatprep.mubr.bf16.mxu0 0
      %461 = vmatmul.mubr.bf16.gmra.mrb[0].mxu0 %v254
      %v462 = vpop.f32.mrb[0].mxu0
      %v463 = vadd.f32 %v374, %v462
      %v464 = vpop.f32.mrb[0].mxu0
      %v465 = vpop.f32.mrb[0].mxu0
      %v466 = vadd.f32 %v377, %v465
      %v467 = vpop.f32.mrb[0].mxu0
      %468 = vdwg.mxu0
      %v469 = vld [vmem:[#allocation2 + $0x2] sm:$0xff]
      %v470 = vld [vmem:[#allocation2 + $0xa] sm:$0xff]
      %v471 = vpack.c.bf16 %v470, %v469
      %s472 = scalar_lea.vmem %s1, 128
      %v473 = vld [vmem:[%s472] sm:$0xf]
      %v474 = vld [vmem:[%s472 + $0x4] sm:$0xf]
      %v475 = vld [vmem:[%s472 + $0x8] sm:$0xf]
      %v476 = vld [vmem:[%s472 + $0xc] sm:$0xf]
      %v477 = vld [vmem:[%s472 + $0x10] sm:$0xf]
      %v478 = vld [vmem:[%s472 + $0x14] sm:$0xf]
      %v479 = vld [vmem:[%s472 + $0x18] sm:$0xf]
      %v480 = vld [vmem:[%s472 + $0x1c] sm:$0xf]
      %v481 = vld [vmem:[%s472 + $0x20] sm:$0xf]
      %v482 = vld [vmem:[%s472 + $0x24] sm:$0xf]
      %v483 = vld [vmem:[%s472 + $0x28] sm:$0xf]
      %v484 = vld [vmem:[%s472 + $0x2c] sm:$0xf]
      %v485 = vld [vmem:[%s472 + $0x30] sm:$0xf]
      %v486 = vld [vmem:[%s472 + $0x34] sm:$0xf]
      %v487 = vld [vmem:[%s472 + $0x38] sm:$0xf]
      %v488 = vld [vmem:[%s472 + $0x3c] sm:$0xf]
      %v505 = vunpack.c.l.b16 %v473
      %v506 = vunpack.c.l.b16 %v474
      %v507 = vunpack.c.l.b16 %v475
      %v508 = vunpack.c.l.b16 %v476
      %v509 = vunpack.c.l.b16 %v477
      %v510 = vunpack.c.l.b16 %v478
      %v511 = vunpack.c.l.b16 %v479
      %v512 = vunpack.c.l.b16 %v480
      %v513 = vunpack.c.l.b16 %v481
      %v514 = vunpack.c.l.b16 %v482
      %v515 = vunpack.c.l.b16 %v483
      %v516 = vunpack.c.l.b16 %v484
      %v517 = vunpack.c.l.b16 %v485
      %v518 = vunpack.c.l.b16 %v486
      %v519 = vunpack.c.l.b16 %v487
      %v520 = vunpack.c.l.b16 %v488
      %v521 = vpack.c.b16 %v506, %v505
      %v522 = vpack.c.b16 %v508, %v507
      %v523 = vpack.c.b16 %v510, %v509
      %v524 = vpack.c.b16 %v512, %v511
      %v525 = vpack.c.b16 %v514, %v513
      %v526 = vpack.c.b16 %v516, %v515
      %v527 = vpack.c.b16 %v518, %v517
      %v528 = vpack.c.b16 %v520, %v519
      %537 = vmatprep.subr.bf16.mxu0 0
      %538 = vmatpush1.bf16.msra.mxu0 %v521
      %539 = vmatprep.subr.bf16.mxu0 0
      %540 = vmatpush1.bf16.msra.mxu0 %v522
      %541 = vmatprep.subr.bf16.mxu0 0
      %542 = vmatpush1.bf16.msra.mxu0 %v523
      %543 = vmatprep.subr.bf16.mxu0 0
      %544 = vmatpush1.bf16.msra.mxu0 %v524
      %545 = vmatprep.subr.bf16.mxu0 0
      %546 = vmatpush1.bf16.msra.mxu0 %v525
      %547 = vmatprep.subr.bf16.mxu0 0
      %548 = vmatpush1.bf16.msra.mxu0 %v526
      %549 = vmatprep.subr.bf16.mxu0 0
      %550 = vmatpush1.bf16.msra.mxu0 %v527
      %551 = vmatprep.subr.bf16.mxu0 0
      %552 = vmatpush1.bf16.msra.mxu0 %v528
      %553 = vmatprep.subr.bf16.mxu0 0
      %554 = vmatpush1.bf16.msra.mxu0 0
      %555 = vmatprep.subr.bf16.mxu0 0
      %556 = vmatpush1.bf16.msra.mxu0 0
      %557 = vmatprep.subr.bf16.mxu0 0
      %558 = vmatpush1.bf16.msra.mxu0 0
      %559 = vmatprep.subr.bf16.mxu0 0
      %560 = vmatpush1.bf16.msra.mxu0 0
      %561 = vmatprep.subr.bf16.mxu0 0
      %562 = vmatpush1.bf16.msra.mxu0 0
      %563 = vmatprep.subr.bf16.mxu0 0
      %564 = vmatpush1.bf16.msra.mxu0 0
      %565 = vmatprep.subr.bf16.mxu0 0
      %566 = vmatpush1.bf16.msra.mxu0 0
      %567 = vmatprep.subr.bf16.mxu0 0
      %568 = vmatpush1.bf16.msra.mxu0 0
      %569 = vmatprep.mubr.bf16.mxu0 0
      %570 = vmatmul.mubr.bf16.gmra.mrb[0].mxu0 %v471
      %v571 = vpop.f32.mrb[0].mxu0
      %v572 = vadd.f32 0.0, %v571
      %v573 = vpop.f32.mrb[0].mxu0
      %v574 = vpop.f32.mrb[0].mxu0
      %v575 = vadd.f32 0.0, %v574
      %v576 = vpop.f32.mrb[0].mxu0
      %577 = vdwg.mxu0
      %v578 = vadd.f32 %v463, %v572
      %v579 = vadd.f32 %v466, %v575
      %v580 = vld [vmem:[#allocation2 + $0x3] sm:$0xff]
      %v581 = vld [vmem:[#allocation2 + $0xb] sm:$0xff]
      %v582 = vpack.c.bf16 %v581, %v580
      %s583 = scalar_lea.vmem %s1, 192
      %v584 = vld [vmem:[%s583] sm:$0xf]
      %v585 = vld [vmem:[%s583 + $0x4] sm:$0xf]
      %v586 = vld [vmem:[%s583 + $0x8] sm:$0xf]
      %v587 = vld [vmem:[%s583 + $0xc] sm:$0xf]
      %v588 = vld [vmem:[%s583 + $0x10] sm:$0xf]
      %v589 = vld [vmem:[%s583 + $0x14] sm:$0xf]
      %v590 = vld [vmem:[%s583 + $0x18] sm:$0xf]
      %v591 = vld [vmem:[%s583 + $0x1c] sm:$0xf]
      %v592 = vld [vmem:[%s583 + $0x20] sm:$0xf]
      %v593 = vld [vmem:[%s583 + $0x24] sm:$0xf]
      %v594 = vld [vmem:[%s583 + $0x28] sm:$0xf]
      %v595 = vld [vmem:[%s583 + $0x2c] sm:$0xf]
      %v596 = vld [vmem:[%s583 + $0x30] sm:$0xf]
      %v597 = vld [vmem:[%s583 + $0x34] sm:$0xf]
      %v598 = vld [vmem:[%s583 + $0x38] sm:$0xf]
      %v599 = vld [vmem:[%s583 + $0x3c] sm:$0xf]
      %v616 = vunpack.c.l.b16 %v584
      %v617 = vunpack.c.l.b16 %v585
      %v618 = vunpack.c.l.b16 %v586
      %v619 = vunpack.c.l.b16 %v587
      %v620 = vunpack.c.l.b16 %v588
      %v621 = vunpack.c.l.b16 %v589
      %v622 = vunpack.c.l.b16 %v590
      %v623 = vunpack.c.l.b16 %v591
      %v624 = vunpack.c.l.b16 %v592
      %v625 = vunpack.c.l.b16 %v593
      %v626 = vunpack.c.l.b16 %v594
      %v627 = vunpack.c.l.b16 %v595
      %v628 = vunpack.c.l.b16 %v596
      %v629 = vunpack.c.l.b16 %v597
      %v630 = vunpack.c.l.b16 %v598
      %v631 = vunpack.c.l.b16 %v599
      %v632 = vpack.c.b16 %v617, %v616
      %v633 = vpack.c.b16 %v619, %v618
      %v634 = vpack.c.b16 %v621, %v620
      %v635 = vpack.c.b16 %v623, %v622
      %v636 = vpack.c.b16 %v625, %v624
      %v637 = vpack.c.b16 %v627, %v626
      %v638 = vpack.c.b16 %v629, %v628
      %v639 = vpack.c.b16 %v631, %v630
      %648 = vmatprep.subr.bf16.mxu0 0
      %649 = vmatpush1.bf16.msra.mxu0 %v632
      %650 = vmatprep.subr.bf16.mxu0 0
      %651 = vmatpush1.bf16.msra.mxu0 %v633
      %652 = vmatprep.subr.bf16.mxu0 0
      %653 = vmatpush1.bf16.msra.mxu0 %v634
      %654 = vmatprep.subr.bf16.mxu0 0
      %655 = vmatpush1.bf16.msra.mxu0 %v635
      %656 = vmatprep.subr.bf16.mxu0 0
      %657 = vmatpush1.bf16.msra.mxu0 %v636
      %658 = vmatprep.subr.bf16.mxu0 0
      %659 = vmatpush1.bf16.msra.mxu0 %v637
      %660 = vmatprep.subr.bf16.mxu0 0
      %661 = vmatpush1.bf16.msra.mxu0 %v638
      %662 = vmatprep.subr.bf16.mxu0 0
      %663 = vmatpush1.bf16.msra.mxu0 %v639
      %664 = vmatprep.subr.bf16.mxu0 0
      %665 = vmatpush1.bf16.msra.mxu0 0
      %666 = vmatprep.subr.bf16.mxu0 0
      %667 = vmatpush1.bf16.msra.mxu0 0
      %668 = vmatprep.subr.bf16.mxu0 0
      %669 = vmatpush1.bf16.msra.mxu0 0
      %670 = vmatprep.subr.bf16.mxu0 0
      %671 = vmatpush1.bf16.msra.mxu0 0
      %672 = vmatprep.subr.bf16.mxu0 0
      %673 = vmatpush1.bf16.msra.mxu0 0
      %674 = vmatprep.subr.bf16.mxu0 0
      %675 = vmatpush1.bf16.msra.mxu0 0
      %676 = vmatprep.subr.bf16.mxu0 0
      %677 = vmatpush1.bf16.msra.mxu0 0
      %678 = vmatprep.subr.bf16.mxu0 0
      %679 = vmatpush1.bf16.msra.mxu0 0
      %680 = vmatprep.mubr.bf16.mxu0 0
      %681 = vmatmul.mubr.bf16.gmra.mrb[0].mxu0 %v582
      %v682 = vpop.f32.mrb[0].mxu0
      %v683 = vadd.f32 0.0, %v682
      %v684 = vpop.f32.mrb[0].mxu0
      %v685 = vpop.f32.mrb[0].mxu0
      %v686 = vadd.f32 0.0, %v685
      %v687 = vpop.f32.mrb[0].mxu0
      %688 = vdwg.mxu0
      %v689 = vadd.f32 %v578, %v683
      %v690 = vadd.f32 %v579, %v686
      %v691 = vld [vmem:[#allocation2 + $0x4] sm:$0xff]
      %v692 = vld [vmem:[#allocation2 + $0xc] sm:$0xff]
      %v693 = vpack.c.bf16 %v692, %v691
      %s694 = scalar_lea.vmem %s1, 256
      %v695 = vld [vmem:[%s694] sm:$0xf]
      %v696 = vld [vmem:[%s694 + $0x4] sm:$0xf]
      %v697 = vld [vmem:[%s694 + $0x8] sm:$0xf]
      %v698 = vld [vmem:[%s694 + $0xc] sm:$0xf]
      %v699 = vld [vmem:[%s694 + $0x10] sm:$0xf]
      %v700 = vld [vmem:[%s694 + $0x14] sm:$0xf]
      %v701 = vld [vmem:[%s694 + $0x18] sm:$0xf]
      %v702 = vld [vmem:[%s694 + $0x1c] sm:$0xf]
      %v703 = vld [vmem:[%s694 + $0x20] sm:$0xf]
      %v704 = vld [vmem:[%s694 + $0x24] sm:$0xf]
      %v705 = vld [vmem:[%s694 + $0x28] sm:$0xf]
      %v706 = vld [vmem:[%s694 + $0x2c] sm:$0xf]
      %v707 = vld [vmem:[%s694 + $0x30] sm:$0xf]
      %v708 = vld [vmem:[%s694 + $0x34] sm:$0xf]
      %v709 = vld [vmem:[%s694 + $0x38] sm:$0xf]
      %v710 = vld [vmem:[%s694 + $0x3c] sm:$0xf]
      %v727 = vunpack.c.l.b16 %v695
      %v728 = vunpack.c.l.b16 %v696
      %v729 = vunpack.c.l.b16 %v697
      %v730 = vunpack.c.l.b16 %v698
      %v731 = vunpack.c.l.b16 %v699
      %v732 = vunpack.c.l.b16 %v700
      %v733 = vunpack.c.l.b16 %v701
      %v734 = vunpack.c.l.b16 %v702
      %v735 = vunpack.c.l.b16 %v703
      %v736 = vunpack.c.l.b16 %v704
      %v737 = vunpack.c.l.b16 %v705
      %v738 = vunpack.c.l.b16 %v706
      %v739 = vunpack.c.l.b16 %v707
      %v740 = vunpack.c.l.b16 %v708
      %v741 = vunpack.c.l.b16 %v709
      %v742 = vunpack.c.l.b16 %v710
      %v743 = vpack.c.b16 %v728, %v727
      %v744 = vpack.c.b16 %v730, %v729
      %v745 = vpack.c.b16 %v732, %v731
      %v746 = vpack.c.b16 %v734, %v733
      %v747 = vpack.c.b16 %v736, %v735
      %v748 = vpack.c.b16 %v738, %v737
      %v749 = vpack.c.b16 %v740, %v739
      %v750 = vpack.c.b16 %v742, %v741
      %759 = vmatprep.subr.bf16.mxu0 0
      %760 = vmatpush1.bf16.msra.mxu0 %v743
      %761 = vmatprep.subr.bf16.mxu0 0
      %762 = vmatpush1.bf16.msra.mxu0 %v744
      %763 = vmatprep.subr.bf16.mxu0 0
      %764 = vmatpush1.bf16.msra.mxu0 %v745
      %765 = vmatprep.subr.bf16.mxu0 0
      %766 = vmatpush1.bf16.msra.mxu0 %v746
      %767 = vmatprep.subr.bf16.mxu0 0
      %768 = vmatpush1.bf16.msra.mxu0 %v747
      %769 = vmatprep.subr.bf16.mxu0 0
      %770 = vmatpush1.bf16.msra.mxu0 %v748
      %771 = vmatprep.subr.bf16.mxu0 0
      %772 = vmatpush1.bf16.msra.mxu0 %v749
      %773 = vmatprep.subr.bf16.mxu0 0
      %774 = vmatpush1.bf16.msra.mxu0 %v750
      %775 = vmatprep.subr.bf16.mxu0 0
      %776 = vmatpush1.bf16.msra.mxu0 0
      %777 = vmatprep.subr.bf16.mxu0 0
      %778 = vmatpush1.bf16.msra.mxu0 0
      %779 = vmatprep.subr.bf16.mxu0 0
      %780 = vmatpush1.bf16.msra.mxu0 0
      %781 = vmatprep.subr.bf16.mxu0 0
      %782 = vmatpush1.bf16.msra.mxu0 0
      %783 = vmatprep.subr.bf16.mxu0 0
      %784 = vmatpush1.bf16.msra.mxu0 0
      %785 = vmatprep.subr.bf16.mxu0 0
      %786 = vmatpush1.bf16.msra.mxu0 0
      %787 = vmatprep.subr.bf16.mxu0 0
      %788 = vmatpush1.bf16.msra.mxu0 0
      %789 = vmatprep.subr.bf16.mxu0 0
      %790 = vmatpush1.bf16.msra.mxu0 0
      %791 = vmatprep.mubr.bf16.mxu0 0
      %792 = vmatmul.mubr.bf16.gmra.mrb[0].mxu0 %v693
      %v793 = vpop.f32.mrb[0].mxu0
      %v794 = vadd.f32 0.0, %v793
      %v795 = vpop.f32.mrb[0].mxu0
      %v796 = vpop.f32.mrb[0].mxu0
      %v797 = vadd.f32 0.0, %v796
      %v798 = vpop.f32.mrb[0].mxu0
      %799 = vdwg.mxu0
      %v800 = vadd.f32 %v689, %v794
      %v801 = vadd.f32 %v690, %v797
      %v802 = vld [vmem:[#allocation2 + $0x5] sm:$0xff]
      %v803 = vld [vmem:[#allocation2 + $0xd] sm:$0xff]
      %v804 = vpack.c.bf16 %v803, %v802
      %s805 = scalar_lea.vmem %s1, 320
      %v806 = vld [vmem:[%s805] sm:$0xf]
      %v807 = vld [vmem:[%s805 + $0x4] sm:$0xf]
      %v808 = vld [vmem:[%s805 + $0x8] sm:$0xf]
      %v809 = vld [vmem:[%s805 + $0xc] sm:$0xf]
      %v810 = vld [vmem:[%s805 + $0x10] sm:$0xf]
      %v811 = vld [vmem:[%s805 + $0x14] sm:$0xf]
      %v812 = vld [vmem:[%s805 + $0x18] sm:$0xf]
      %v813 = vld [vmem:[%s805 + $0x1c] sm:$0xf]
      %v814 = vld [vmem:[%s805 + $0x20] sm:$0xf]
      %v815 = vld [vmem:[%s805 + $0x24] sm:$0xf]
      %v816 = vld [vmem:[%s805 + $0x28] sm:$0xf]
      %v817 = vld [vmem:[%s805 + $0x2c] sm:$0xf]
      %v818 = vld [vmem:[%s805 + $0x30] sm:$0xf]
      %v819 = vld [vmem:[%s805 + $0x34] sm:$0xf]
      %v820 = vld [vmem:[%s805 + $0x38] sm:$0xf]
      %v821 = vld [vmem:[%s805 + $0x3c] sm:$0xf]
      %v838 = vunpack.c.l.b16 %v806
      %v839 = vunpack.c.l.b16 %v807
      %v840 = vunpack.c.l.b16 %v808
      %v841 = vunpack.c.l.b16 %v809
      %v842 = vunpack.c.l.b16 %v810
      %v843 = vunpack.c.l.b16 %v811
      %v844 = vunpack.c.l.b16 %v812
      %v845 = vunpack.c.l.b16 %v813
      %v846 = vunpack.c.l.b16 %v814
      %v847 = vunpack.c.l.b16 %v815
      %v848 = vunpack.c.l.b16 %v816
      %v849 = vunpack.c.l.b16 %v817
      %v850 = vunpack.c.l.b16 %v818
      %v851 = vunpack.c.l.b16 %v819
      %v852 = vunpack.c.l.b16 %v820
      %v853 = vunpack.c.l.b16 %v821
      %v854 = vpack.c.b16 %v839, %v838
      %v855 = vpack.c.b16 %v841, %v840
      %v856 = vpack.c.b16 %v843, %v842
      %v857 = vpack.c.b16 %v845, %v844
      %v858 = vpack.c.b16 %v847, %v846
      %v859 = vpack.c.b16 %v849, %v848
      %v860 = vpack.c.b16 %v851, %v850
      %v861 = vpack.c.b16 %v853, %v852
      %870 = vmatprep.subr.bf16.mxu0 0
      %871 = vmatpush1.bf16.msra.mxu0 %v854
      %872 = vmatprep.subr.bf16.mxu0 0
      %873 = vmatpush1.bf16.msra.mxu0 %v855
      %874 = vmatprep.subr.bf16.mxu0 0
      %875 = vmatpush1.bf16.msra.mxu0 %v856
      %876 = vmatprep.subr.bf16.mxu0 0
      %877 = vmatpush1.bf16.msra.mxu0 %v857
      %878 = vmatprep.subr.bf16.mxu0 0
      %879 = vmatpush1.bf16.msra.mxu0 %v858
      %880 = vmatprep.subr.bf16.mxu0 0
      %881 = vmatpush1.bf16.msra.mxu0 %v859
      %882 = vmatprep.subr.bf16.mxu0 0
      %883 = vmatpush1.bf16.msra.mxu0 %v860
      %884 = vmatprep.subr.bf16.mxu0 0
      %885 = vmatpush1.bf16.msra.mxu0 %v861
      %886 = vmatprep.subr.bf16.mxu0 0
      %887 = vmatpush1.bf16.msra.mxu0 0
      %888 = vmatprep.subr.bf16.mxu0 0
      %889 = vmatpush1.bf16.msra.mxu0 0
      %890 = vmatprep.subr.bf16.mxu0 0
      %891 = vmatpush1.bf16.msra.mxu0 0
      %892 = vmatprep.subr.bf16.mxu0 0
      %893 = vmatpush1.bf16.msra.mxu0 0
      %894 = vmatprep.subr.bf16.mxu0 0
      %895 = vmatpush1.bf16.msra.mxu0 0
      %896 = vmatprep.subr.bf16.mxu0 0
      %897 = vmatpush1.bf16.msra.mxu0 0
      %898 = vmatprep.subr.bf16.mxu0 0
      %899 = vmatpush1.bf16.msra.mxu0 0
      %900 = vmatprep.subr.bf16.mxu0 0
      %901 = vmatpush1.bf16.msra.mxu0 0
      %902 = vmatprep.mubr.bf16.mxu0 0
      %903 = vmatmul.mubr.bf16.gmra.mrb[0].mxu0 %v804
      %v904 = vpop.f32.mrb[0].mxu0
      %v905 = vadd.f32 0.0, %v904
      %v906 = vpop.f32.mrb[0].mxu0
      %v907 = vpop.f32.mrb[0].mxu0
      %v908 = vadd.f32 0.0, %v907
      %v909 = vpop.f32.mrb[0].mxu0
      %910 = vdwg.mxu0
      %v911 = vadd.f32 %v800, %v905
      %v912 = vadd.f32 %v801, %v908
      %v913 = vld [vmem:[#allocation2 + $0x6] sm:$0xff]
      %v914 = vld [vmem:[#allocation2 + $0xe] sm:$0xff]
      %v915 = vpack.c.bf16 %v914, %v913
      %s916 = scalar_lea.vmem %s1, 384
      %v917 = vld [vmem:[%s916] sm:$0xf]
      %v918 = vld [vmem:[%s916 + $0x4] sm:$0xf]
      %v919 = vld [vmem:[%s916 + $0x8] sm:$0xf]
      %v920 = vld [vmem:[%s916 + $0xc] sm:$0xf]
      %v921 = vld [vmem:[%s916 + $0x10] sm:$0xf]
      %v922 = vld [vmem:[%s916 + $0x14] sm:$0xf]
      %v923 = vld [vmem:[%s916 + $0x18] sm:$0xf]
      %v924 = vld [vmem:[%s916 + $0x1c] sm:$0xf]
      %v925 = vld [vmem:[%s916 + $0x20] sm:$0xf]
      %v926 = vld [vmem:[%s916 + $0x24] sm:$0xf]
      %v927 = vld [vmem:[%s916 + $0x28] sm:$0xf]
      %v928 = vld [vmem:[%s916 + $0x2c] sm:$0xf]
      %v929 = vld [vmem:[%s916 + $0x30] sm:$0xf]
      %v930 = vld [vmem:[%s916 + $0x34] sm:$0xf]
      %v931 = vld [vmem:[%s916 + $0x38] sm:$0xf]
      %v932 = vld [vmem:[%s916 + $0x3c] sm:$0xf]
      %v949 = vunpack.c.l.b16 %v917
      %v950 = vunpack.c.l.b16 %v918
      %v951 = vunpack.c.l.b16 %v919
      %v952 = vunpack.c.l.b16 %v920
      %v953 = vunpack.c.l.b16 %v921
      %v954 = vunpack.c.l.b16 %v922
      %v955 = vunpack.c.l.b16 %v923
      %v956 = vunpack.c.l.b16 %v924
      %v957 = vunpack.c.l.b16 %v925
      %v958 = vunpack.c.l.b16 %v926
      %v959 = vunpack.c.l.b16 %v927
      %v960 = vunpack.c.l.b16 %v928
      %v961 = vunpack.c.l.b16 %v929
      %v962 = vunpack.c.l.b16 %v930
      %v963 = vunpack.c.l.b16 %v931
      %v964 = vunpack.c.l.b16 %v932
      %v965 = vpack.c.b16 %v950, %v949
      %v966 = vpack.c.b16 %v952, %v951
      %v967 = vpack.c.b16 %v954, %v953
      %v968 = vpack.c.b16 %v956, %v955
      %v969 = vpack.c.b16 %v958, %v957
      %v970 = vpack.c.b16 %v960, %v959
      %v971 = vpack.c.b16 %v962, %v961
      %v972 = vpack.c.b16 %v964, %v963
      %981 = vmatprep.subr.bf16.mxu0 0
      %982 = vmatpush1.bf16.msra.mxu0 %v965
      %983 = vmatprep.subr.bf16.mxu0 0
      %984 = vmatpush1.bf16.msra.mxu0 %v966
      %985 = vmatprep.subr.bf16.mxu0 0
      %986 = vmatpush1.bf16.msra.mxu0 %v967
      %987 = vmatprep.subr.bf16.mxu0 0
      %988 = vmatpush1.bf16.msra.mxu0 %v968
      %989 = vmatprep.subr.bf16.mxu0 0
      %990 = vmatpush1.bf16.msra.mxu0 %v969
      %991 = vmatprep.subr.bf16.mxu0 0
      %992 = vmatpush1.bf16.msra.mxu0 %v970
      %993 = vmatprep.subr.bf16.mxu0 0
      %994 = vmatpush1.bf16.msra.mxu0 %v971
      %995 = vmatprep.subr.bf16.mxu0 0
      %996 = vmatpush1.bf16.msra.mxu0 %v972
      %997 = vmatprep.subr.bf16.mxu0 0
      %998 = vmatpush1.bf16.msra.mxu0 0
      %999 = vmatprep.subr.bf16.mxu0 0
      %1000 = vmatpush1.bf16.msra.mxu0 0
      %1001 = vmatprep.subr.bf16.mxu0 0
      %1002 = vmatpush1.bf16.msra.mxu0 0
      %1003 = vmatprep.subr.bf16.mxu0 0
      %1004 = vmatpush1.bf16.msra.mxu0 0
      %1005 = vmatprep.subr.bf16.mxu0 0
      %1006 = vmatpush1.bf16.msra.mxu0 0
      %1007 = vmatprep.subr.bf16.mxu0 0
      %1008 = vmatpush1.bf16.msra.mxu0 0
      %1009 = vmatprep.subr.bf16.mxu0 0
      %1010 = vmatpush1.bf16.msra.mxu0 0
      %1011 = vmatprep.subr.bf16.mxu0 0
      %1012 = vmatpush1.bf16.msra.mxu0 0
      %1013 = vmatprep.mubr.bf16.mxu0 0
      %1014 = vmatmul.mubr.bf16.gmra.mrb[0].mxu0 %v915
      %v1015 = vpop.f32.mrb[0].mxu0
      %v1016 = vadd.f32 0.0, %v1015
      %v1017 = vpop.f32.mrb[0].mxu0
      %v1018 = vpop.f32.mrb[0].mxu0
      %v1019 = vadd.f32 0.0, %v1018
      %v1020 = vpop.f32.mrb[0].mxu0
      %1021 = vdwg.mxu0
      %v1022 = vadd.f32 %v911, %v1016
      %v1023 = vadd.f32 %v912, %v1019
      %v1024 = vld [vmem:[%s2] sm:$0x1]
      %v1026 = vlaneseq
      %v1027 = vshrl.u32 %v1026, 7
      %v1028 = vsub.s32 0, %v1027
      %v1029 = vrot.slane %v1024, %v1028
      %v1031 = vadd.f32 %v1022, %v1029
      %v1032 = vadd.f32 %v1023, %v1029
      %v1033 = vpack.c.bf16 %v1032, %v1031
      %v1035 = vunpack.c.l.b16 %v1033
      %v1036 = vunpack.c.h.b16 %v1033
      %v1037 = vpack.c.b16 %v1035, %v1035
      %v1038 = vpack.c.b16 %v1036, %v1036
      %1041 = vst [vmem:[%s235] sm:$0xf] %v1037
      %1042 = vst [vmem:[%s235 + $0x4] sm:$0xf] %v1038
      %v1043 = vadd.f32 %v1031, %v1032
      %v1044 = vrot.slane %v1043, 4
      %v1045 = vadd.f32 %v1043, %v1044
      %v1046 = vrot.slane %v1045, 2
      %v1047 = vadd.f32 %v1045, %v1046
      %v1048 = vrot.slane %v1047, 1
      %v1049 = vadd.f32 %v1047, %v1048
      %v1050 = vmul.f32 %v1049, 0.0625
      %1051 = vst [vmem:[%s238] sm:$0x1] %v1049
      %v1052 = vsub.f32 %v1031, %v1050
      %v1053 = vsub.f32 %v1032, %v1050
      %v1054 = vmul.f32 %v1052, %v1052
      %v1055 = vmul.f32 %v1053, %v1053
      %v1056 = vadd.f32 %v1054, %v1055
      %v1057 = vrot.slane %v1056, 4
      %v1058 = vadd.f32 %v1056, %v1057
      %v1059 = vrot.slane %v1058, 2
      %v1060 = vadd.f32 %v1058, %v1059
      %v1061 = vrot.slane %v1060, 1
      %v1062 = vadd.f32 %v1060, %v1061
      %1063 = vst [vmem:[%s241] sm:$0x1] %v1062
      %p1064 = scmp.lt.s32.totalorder %s17, 1
      %s1065 = scalar_select %p1064, %s17, 1
      %s1066 = smul.addr %s1065, 2
      %s1067 = smul.addr %s1066, 4
      %s1068 = scalar_lea.vmem %s3, %s1067
      %p1069 = scmp.lt.s32.totalorder %s17, 1
      %s1070 = scalar_select %p1069, %s17, 1
      %s1071 = scalar_lea.vmem %s4, %s1070
      %p1072 = scmp.lt.s32.totalorder %s17, 1
      %s1073 = scalar_select %p1072, %s17, 1
      %s1074 = scalar_lea.vmem %s5, %s1073
      // Predicated region
      $region33: #{inception_block.2} parent=31 // pred_check
        %p1075 = pneg %p103
      $region34: #{inception_block.2} parent=31 // pred_check_branch
        %1077 = sbr.rel (%p1075) target = $region36
      $region35: #{inception_block.2} parent=31 // pred_region
        _
      $region36: #{inception_block.2} parent=31 // pred_fallthru
        _
      // Predicated region
      $region37: #{inception_block.2} parent=31 // pred_check
        %p1078 = pneg %p129
      $region38: #{inception_block.2} parent=31 // pred_check_branch
        %1080 = sbr.rel (%p1078) target = $region40
      $region39: #{inception_block.2} parent=31 // pred_region
        _
      $region40: #{inception_block.2} parent=31 // pred_fallthru
        _
      // Predicated region
      $region41: #{inception_block.2} parent=31 // pred_check
        %p1081 = pneg %p155
      $region42: #{inception_block.2} parent=31 // pred_check_branch
        %1083 = sbr.rel (%p1081) target = $region44
      $region43: #{inception_block.2} parent=31 // pred_region
        _
      $region44: #{inception_block.2} parent=31 // pred_fallthru
        _
    $region32: #{inception_block.2} parent=5 // pred_fallthru
      _
    %p1084 = scmp.le.s32.totalorder 2, %s12
    // Predicated region
    $region45: #{inception_block.2} parent=5 // pred_check
      %p1085 = pneg %p1084
    $region46: #{inception_block.2} parent=5 // pred_check_branch
      %1087 = sbr.rel (%p1085) target = $region48
    $region47: #{inception_block.2} parent=5 // pred_region
      %s1088 = ssub.s32 %s12, 2
      // Predicated region
      $region49: #{inception_block.2} parent=47 // pred_check
        %p1089 = pneg %p109
      $region50: #{inception_block.2} parent=47 // pred_check_branch
        %1091 = sbr.rel (%p1089) target = $region52
      $region51: #{inception_block.2} parent=47 // pred_region
        %p1092 = scmp.lt.s32.totalorder %s18, 1
        %s1093 = scalar_select %p1092, %s18, 1
        %s1094 = smul.addr %s1093, 2
        %s1095 = smul.addr %s1094, 4
        %s1096 = scalar_lea.vmem %s3, %s1095
      $region52: #{inception_block.2} parent=47 // pred_fallthru
        _
      // Predicated region
      $region53: #{inception_block.2} parent=47 // pred_check
        %p1097 = pneg %p135
      $region54: #{inception_block.2} parent=47 // pred_check_branch
        %1099 = sbr.rel (%p1097) target = $region56
      $region55: #{inception_block.2} parent=47 // pred_region
        %p1100 = scmp.lt.s32.totalorder %s18, 1
        %s1101 = scalar_select %p1100, %s18, 1
        %s1102 = scalar_lea.vmem %s4, %s1101
      $region56: #{inception_block.2} parent=47 // pred_fallthru
        _
      // Predicated region
      $region57: #{inception_block.2} parent=47 // pred_check
        %p1103 = pneg %p161
      $region58: #{inception_block.2} parent=47 // pred_check_branch
        %1105 = sbr.rel (%p1103) target = $region60
      $region59: #{inception_block.2} parent=47 // pred_region
        %p1106 = scmp.lt.s32.totalorder %s18, 1
        %s1107 = scalar_select %p1106, %s18, 1
        %s1108 = scalar_lea.vmem %s5, %s1107
      $region60: #{inception_block.2} parent=47 // pred_fallthru
        _
    $region48: #{inception_block.2} parent=5 // pred_fallthru
      _
  $region6: #{inception_block.2} parent=0 // loop_footer
    %s16 = sadd.s32 1, %s12
  $region7: #{inception_block.2} parent=0 // loop_footer_branch
    %11 = sbr.rel target = $region3
  $region8: #{inception_block.2} parent=0 // loop_exit
    _

// kernel: tile.33
$region0: #{tile.33}
  #allocation0 [shape = 's32[1]{0}', space=sflag, size = 0x4, scoped, tag = 'scoped memory for tile.33']
  %s0 = inlined_call_operand.vmem [shape: f32[2], index: 0, kind: input, shape index: {}]
  %s1 = inlined_call_operand.vmem [shape: f32[4,2], index: 1, kind: output, shape index: {}]
  // Predicated region
  $region2: #{tile.33} parent=0 // pred_check
    _
  $region3: #{tile.33} parent=0 // pred_check_branch
    %3 = sbr.rel (0) target = $region5
  $region4: #{tile.33} parent=0 // pred_region
    _
  $region5: #{tile.33} parent=0 // pred_fallthru
    _
  %v4 = vld [vmem:[%s0] ss:$0 sm:$0xff]
  %5 = vst [vmem:[%s1] sm:$0xf] %v4

// kernel: inception_block.3
$region0: #{inception_block.3}
  #allocation0 [shape = 'u32[]', space=smem, size = 0x4, offset = 0x4, fixed_abs, tag = 'smem constant byte address 0x4 - core index']
  #allocation1 [shape = 'u32[144,128]{1,0:T(1,128)}', space=vmem, size = 0x12000, scoped, tag = 'internal scratch']
  %s0 = inlined_call_operand.vmem [shape: bf16[2,16,128], index: 0, kind: input, shape index: {}]
  %s1 = inlined_call_operand.vmem [shape: bf16[2,16,128], index: 1, kind: input, shape index: {}]
  %s2 = inlined_call_operand.vmem [shape: f32[1,128], index: 2, kind: input, shape index: {}]
  %s3 = inlined_call_operand.vmem [shape: f32[1,128], index: 3, kind: input, shape index: {}]
  %s4 = inlined_call_operand.vmem [shape: f32[2,16,128], index: 4, kind: output, shape index: {}]
  %s5 = sld [smem:[#allocation0]]
  $region49: #{inception_block.3} parent=0
    _
  %s7 = ssub.s32 1, %s5
  %s8 = scalar_select 0, %s7, %s5
  loop: start=0, step=1, limit=4
  $region2: #{inception_block.3} parent=0 // loop_pre_header
    _
  $region3: #{inception_block.3} parent=0 // loop_header
    %s10 = sphi 0, %s14
    %p11 = scmp.ge.s32.totalorder %s10, 4
    %s17 = sphi 0, %s29
    %s18 = sphi 0, %s25
    %s19 = sphi 0, %s17
    %s20 = sphi 0, %s18
    %s21 = sphi 0, %s19
    %s22 = sphi 0, %s20
    %s34 = sphi 0, %s36
    %s37 = sphi 0, %s34
    %s38 = sphi 0, %s37
    %s54 = sphi 0, %s38
    %s62 = sphi 0, %s64
    %s65 = sphi 0, %s62
    %s66 = sphi 0, %s65
    %s82 = sphi 0, %s66
    %s86 = sphi 0, %s86
    %s88 = sphi 0, %s86
    %s89 = sphi 0, %s88
    %s103 = sphi 0, %s89
    %s107 = sphi 0, %s107
    %s109 = sphi 0, %s107
    %s110 = sphi 0, %s109
    %s124 = sphi 0, %s110
    %s132 = sphi 0, %s134
    %s135 = sphi 0, %s132
    %s136 = sphi 0, %s135
    %s152 = sphi 0, %s136
  $region4: #{inception_block.3} parent=0 // loop_header_branch
    %13 = sbr.rel (%p11) target = $region8
  $region5: #{inception_block.3} parent=0 // loop_body
    %s15 = ssub.s32 %s10, 1
    %s16 = ssub.s32 %s10, 2
    %s23 = sadd.s32 1, %s18
    %p24 = scmp.ge.s32.totalorder %s23, 1
    %s25 = scalar_select %p24, 0, %s23
    %s26 = sadd.s32 1, %s17
    %s27 = scalar_select %p24, %s26, %s17
    %p28 = scmp.ge.s32.totalorder %s27, 2
    %s29 = scalar_select %p28, 0, %s27
    %s30 = ssub.s32 %s17, %s29
    %s31 = ssub.s32 %s18, %s25
    %s32 = sor.u32 %s30, %s31
    %p33 = scmp.eq.s32.totalorder %s32, 0
    %s35 = sadd.s32 %s34, 1
    %s36 = scalar_select %p33, %s34, %s35
    %p39 = pneg %p33
    %p40 = scmp.eq.s32.totalorder %s10, 1
    %p41 = por %p39, %p40
    %p42 = scmp.ne.s32.totalorder %s34, %s37
    %p43 = scmp.eq.s32.totalorder %s10, 0
    %p44 = por %p42, %p43
    %p45 = scmp.ne.s32.totalorder %s34, %s37
    %p46 = scmp.eq.s32.totalorder %s15, 1
    %p47 = por %p45, %p46
    %p48 = scmp.ne.s32.totalorder %s37, %s38
    %p49 = scmp.eq.s32.totalorder %s15, 0
    %p50 = por %p48, %p49
    %p51 = scmp.ne.s32.totalorder %s37, %s38
    %p52 = scmp.eq.s32.totalorder %s16, 1
    %p53 = por %p51, %p52
    %p55 = scmp.ne.s32.totalorder %s38, %s54
    %p56 = scmp.eq.s32.totalorder %s16, 0
    %p57 = por %p55, %p56
    %s58 = ssub.s32 %s17, %s29
    %s59 = ssub.s32 %s18, %s25
    %s60 = sor.u32 %s58, %s59
    %p61 = scmp.eq.s32.totalorder %s60, 0
    %s63 = sadd.s32 %s62, 1
    %s64 = scalar_select %p61, %s62, %s63
    %p67 = pneg %p61
    %p68 = scmp.eq.s32.totalorder %s10, 1
    %p69 = por %p67, %p68
    %p70 = scmp.ne.s32.totalorder %s62, %s65
    %p71 = scmp.eq.s32.totalorder %s10, 0
    %p72 = por %p70, %p71
    %p73 = scmp.ne.s32.totalorder %s62, %s65
    %p74 = scmp.eq.s32.totalorder %s15, 1
    %p75 = por %p73, %p74
    %p76 = scmp.ne.s32.totalorder %s65, %s66
    %p77 = scmp.eq.s32.totalorder %s15, 0
    %p78 = por %p76, %p77
    %p79 = scmp.ne.s32.totalorder %s65, %s66
    %p80 = scmp.eq.s32.totalorder %s16, 1
    %p81 = por %p79, %p80
    %p83 = scmp.ne.s32.totalorder %s66, %s82
    %p84 = scmp.eq.s32.totalorder %s16, 0
    %p85 = por %p83, %p84
    %s87 = sadd.s32 %s86, 1
    %p90 = scmp.eq.s32.totalorder %s10, 1
    %p91 = scmp.ne.s32.totalorder %s86, %s88
    %p92 = scmp.eq.s32.totalorder %s10, 0
    %p93 = por %p91, %p92
    %p94 = scmp.ne.s32.totalorder %s86, %s88
    %p95 = scmp.eq.s32.totalorder %s15, 1
    %p96 = por %p94, %p95
    %p97 = scmp.ne.s32.totalorder %s88, %s89
    %p98 = scmp.eq.s32.totalorder %s15, 0
    %p99 = por %p97, %p98
    %p100 = scmp.ne.s32.totalorder %s88, %s89
    %p101 = scmp.eq.s32.totalorder %s16, 1
    %p102 = por %p100, %p101
    %p104 = scmp.ne.s32.totalorder %s89, %s103
    %p105 = scmp.eq.s32.totalorder %s16, 0
    %p106 = por %p104, %p105
    %s108 = sadd.s32 %s107, 1
    %p111 = scmp.eq.s32.totalorder %s10, 1
    %p112 = scmp.ne.s32.totalorder %s107, %s109
    %p113 = scmp.eq.s32.totalorder %s10, 0
    %p114 = por %p112, %p113
    %p115 = scmp.ne.s32.totalorder %s107, %s109
    %p116 = scmp.eq.s32.totalorder %s15, 1
    %p117 = por %p115, %p116
    %p118 = scmp.ne.s32.totalorder %s109, %s110
    %p119 = scmp.eq.s32.totalorder %s15, 0
    %p120 = por %p118, %p119
    %p121 = scmp.ne.s32.totalorder %s109, %s110
    %p122 = scmp.eq.s32.totalorder %s16, 1
    %p123 = por %p121, %p122
    %p125 = scmp.ne.s32.totalorder %s110, %s124
    %p126 = scmp.eq.s32.totalorder %s16, 0
    %p127 = por %p125, %p126
    %s128 = ssub.s32 %s17, %s29
    %s129 = ssub.s32 %s18, %s25
    %s130 = sor.u32 %s128, %s129
    %p131 = scmp.eq.s32.totalorder %s130, 0
    %s133 = sadd.s32 %s132, 1
    %s134 = scalar_select %p131, %s132, %s133
    %p137 = pneg %p131
    %p138 = scmp.eq.s32.totalorder %s10, 1
    %p139 = por %p137, %p138
    %p140 = scmp.ne.s32.totalorder %s132, %s135
    %p141 = scmp.eq.s32.totalorder %s10, 0
    %p142 = por %p140, %p141
    %p143 = scmp.ne.s32.totalorder %s132, %s135
    %p144 = scmp.eq.s32.totalorder %s15, 1
    %p145 = por %p143, %p144
    %p146 = scmp.ne.s32.totalorder %s135, %s136
    %p147 = scmp.eq.s32.totalorder %s15, 0
    %p148 = por %p146, %p147
    %p149 = scmp.ne.s32.totalorder %s135, %s136
    %p150 = scmp.eq.s32.totalorder %s16, 1
    %p151 = por %p149, %p150
    %p153 = scmp.ne.s32.totalorder %s136, %s152
    %p154 = scmp.eq.s32.totalorder %s16, 0
    %p155 = por %p153, %p154
    %p156 = scmp.le.s32.totalorder 1, %s10
    %p157 = scmp.lt.s32.totalorder %s10, 3
    %p158 = pnand %p156, %p157
    %p159 = pneg %p158
    // Predicated region
    $region9: #{inception_block.3} parent=5 // pred_check
      _
    $region10: #{inception_block.3} parent=5 // pred_check_branch
      %161 = sbr.rel (%p158) target = $region12
    $region11: #{inception_block.3} parent=5 // pred_region
      %s162 = ssub.s32 %s10, 1
      // Predicated region
      $region13: #{inception_block.3} parent=11 // pred_check
        %p163 = pneg %p99
      $region14: #{inception_block.3} parent=11 // pred_check_branch
        %165 = sbr.rel (%p163) target = $region16
      $region15: #{inception_block.3} parent=11 // pred_region
        _
      $region16: #{inception_block.3} parent=11 // pred_fallthru
        _
      // Predicated region
      $region17: #{inception_block.3} parent=11 // pred_check
        %p166 = pneg %p120
      $region18: #{inception_block.3} parent=11 // pred_check_branch
        %168 = sbr.rel (%p166) target = $region20
      $region19: #{inception_block.3} parent=11 // pred_region
        _
      $region20: #{inception_block.3} parent=11 // pred_fallthru
        _
    $region12: #{inception_block.3} parent=5 // pred_fallthru
      _
    %p169 = scmp.lt.s32.totalorder %s10, 2
    // Predicated region
    $region21: #{inception_block.3} parent=5 // pred_check
      %p170 = pneg %p169
    $region22: #{inception_block.3} parent=5 // pred_check_branch
      %172 = sbr.rel (%p170) target = $region24
    $region23: #{inception_block.3} parent=5 // pred_region
      // Predicated region
      $region25: #{inception_block.3} parent=23 // pred_check
        %p173 = pneg %p44
      $region26: #{inception_block.3} parent=23 // pred_check_branch
        %175 = sbr.rel (%p173) target = $region28
      $region27: #{inception_block.3} parent=23 // pred_region
        %s176 = smul.u32 2, %s18
        %p177 = scmp.lt.s32.totalorder %s17, 1
        %s178 = scalar_select %p177, %s17, 1
        %p179 = scmp.lt.s32.totalorder %s176, 1
        %s180 = scalar_select %p179, %s176, 1
        %s181 = smul.addr %s178, 2
        %s182 = sadd.s32 %s180, %s181
        %s183 = smul.addr %s182, 4
        %s184 = scalar_lea.vmem %s0, %s183
        %s185 = smul.u32 2, %s18
      $region28: #{inception_block.3} parent=23 // pred_fallthru
        _
      // Predicated region
      $region29: #{inception_block.3} parent=23 // pred_check
        %p186 = pneg %p72
      $region30: #{inception_block.3} parent=23 // pred_check_branch
        %188 = sbr.rel (%p186) target = $region32
      $region31: #{inception_block.3} parent=23 // pred_region
        %s189 = smul.u32 2, %s18
        %p190 = scmp.lt.s32.totalorder %s17, 1
        %s191 = scalar_select %p190, %s17, 1
        %p192 = scmp.lt.s32.totalorder %s189, 1
        %s193 = scalar_select %p192, %s189, 1
        %s194 = smul.addr %s191, 2
        %s195 = sadd.s32 %s193, %s194
        %s196 = smul.addr %s195, 4
        %s197 = scalar_lea.vmem %s1, %s196
        %s198 = smul.u32 2, %s18
      $region32: #{inception_block.3} parent=23 // pred_fallthru
        _
    $region24: #{inception_block.3} parent=5 // pred_fallthru
      _
    %p199 = scmp.le.s32.totalorder 1, %s10
    %p200 = scmp.lt.s32.totalorder %s10, 3
    %p201 = pnand %p199, %p200
    %p202 = pneg %p201
    // Predicated region
    $region33: #{inception_block.3} parent=5 // pred_check
      _
    $region34: #{inception_block.3} parent=5 // pred_check_branch
      %204 = sbr.rel (%p201) target = $region36
    $region35: #{inception_block.3} parent=5 // pred_region
      %s205 = ssub.s32 %s10, 1
      %s206 = smul.u32 2, %s20
      %p207 = scmp.lt.s32.totalorder %s19, 1
      %s208 = scalar_select %p207, %s19, 1
      %p209 = scmp.lt.s32.totalorder %s206, 1
      %s210 = scalar_select %p209, %s206, 1
      %s211 = smul.addr %s208, 2
      %s212 = sadd.s32 %s210, %s211
      %s213 = smul.addr %s212, 4
      %s214 = scalar_lea.vmem %s0, %s213
      %p215 = pneg %p50
      %p216 = pneg %p47
      %s217 = smul.u32 2, %s20
      %p218 = scmp.lt.s32.totalorder %s19, 1
      %s219 = scalar_select %p218, %s19, 1
      %p220 = scmp.lt.s32.totalorder %s217, 1
      %s221 = scalar_select %p220, %s217, 1
      %s222 = smul.addr %s219, 2
      %s223 = sadd.s32 %s221, %s222
      %s224 = smul.addr %s223, 4
      %s225 = scalar_lea.vmem %s1, %s224
      %p226 = pneg %p78
      %p227 = pneg %p75
      %p228 = pneg %p99
      %p229 = pneg %p96
      %p230 = pneg %p120
      %p231 = pneg %p117
      %p232 = pneg %p148
      %p233 = pneg %p145
      %s234 = smul.u32 2, %s20
      %p235 = scmp.lt.s32.totalorder %s19, 1
      %s236 = scalar_select %p235, %s19, 1
      %p237 = scmp.lt.s32.totalorder %s234, 1
      %s238 = scalar_select %p237, %s234, 1
      %s239 = smul.addr %s236, 2
      %s240 = sadd.s32 %s238, %s239
      %s241 = smul.addr %s240, 8
      %s242 = scalar_lea.vmem %s4, %s241
      %s243 = smul.u32 2, %s20
      %p244 = scmp.lt.s32.totalorder %s19, 1
      %s245 = scalar_select %p244, %s19, 1
      %p246 = scmp.lt.s32.totalorder %s243, 1
      %s247 = scalar_select %p246, %s243, 1
      %s248 = smul.addr %s245, 2
      %s249 = sadd.s32 %s247, %s248
      %s250 = smul.addr %s249, 4
      %s251 = scalar_lea.vmem %s0, %s250
      %s252 = smul.u32 2, %s20
      %s253 = smul.u32 2, %s20
      %p254 = scmp.lt.s32.totalorder %s19, 1
      %s255 = scalar_select %p254, %s19, 1
      %p256 = scmp.lt.s32.totalorder %s253, 1
      %s257 = scalar_select %p256, %s253, 1
      %s258 = smul.addr %s255, 2
      %s259 = sadd.s32 %s257, %s258
      %s260 = smul.addr %s259, 4
      %s261 = scalar_lea.vmem %s1, %s260
      %s262 = smul.u32 2, %s20
      %s263 = smul.u32 2, %s20
      %p264 = scmp.lt.s32.totalorder %s19, 1
      %s265 = scalar_select %p264, %s19, 1
      %p266 = scmp.lt.s32.totalorder %s263, 1
      %s267 = scalar_select %p266, %s263, 1
      %s268 = smul.addr %s265, 2
      %s269 = sadd.s32 %s267, %s268
      %s270 = smul.addr %s269, 8
      %s271 = scalar_lea.vmem %s4, %s270
      %s272 = smul.u32 2, %s20
      %v273 = vld [vmem:[%s251] sm:$0xf]
      %v274 = vld [vmem:[%s251 + $0x4] sm:$0xf]
      %v275 = vunpack.c.l.bf16 %v273
      %v276 = vunpack.c.l.bf16 %v274
      %v277 = vld [vmem:[%s2] sm:$0x1]
      %v279 = vlaneseq
      %v280 = vshrl.u32 %v279, 7
      %v281 = vsub.s32 0, %v280
      %v282 = vrot.slane %v277, %v281
      %v284 = vmul.f32 %v275, %v282
      %v285 = vmul.f32 %v276, %v282
      %v286 = vld [vmem:[%s3] sm:$0x1]
      %v288 = vlaneseq
      %v289 = vshrl.u32 %v288, 7
      %v290 = vsub.s32 0, %v289
      %v291 = vrot.slane %v286, %v290
      %v293 = vadd.f32 %v284, %v291
      %v294 = vadd.f32 %v285, %v291
      %v295 = vmax.f32 %v293, 0.0
      %v296 = vmax.f32 %v294, 0.0
      %v297 = vld [vmem:[%s261] sm:$0xf]
      %v298 = vld [vmem:[%s261 + $0x4] sm:$0xf]
      %v299 = vunpack.c.l.bf16 %v297
      %v300 = vunpack.c.l.bf16 %v298
      %v301 = vadd.f32 %v295, %v299
      %v302 = vadd.f32 %v296, %v300
      %v303 = vmax.f32 %v301, 0.0
      %v304 = vmax.f32 %v302, 0.0
      %305 = vst [vmem:[%s271] sm:$0xff] %v303
      %306 = vst [vmem:[%s271 + $0x8] sm:$0xff] %v304
      %s307 = smul.u32 2, %s20
      %p308 = scmp.lt.s32.totalorder %s19, 1
      %s309 = scalar_select %p308, %s19, 1
      %p310 = scmp.lt.s32.totalorder %s307, 1
      %s311 = scalar_select %p310, %s307, 1
      %s312 = smul.addr %s309, 2
      %s313 = sadd.s32 %s311, %s312
      %s314 = smul.addr %s313, 8
      %s315 = scalar_lea.vmem %s4, %s314
      // Predicated region
      $region37: #{inception_block.3} parent=35 // pred_check
        %p316 = pneg %p145
      $region38: #{inception_block.3} parent=35 // pred_check_branch
        %318 = sbr.rel (%p316) target = $region40
      $region39: #{inception_block.3} parent=35 // pred_region
        %s319 = smul.u32 2, %s20
      $region40: #{inception_block.3} parent=35 // pred_fallthru
        _
    $region36: #{inception_block.3} parent=5 // pred_fallthru
      _
    %p320 = scmp.le.s32.totalorder 2, %s10
    // Predicated region
    $region41: #{inception_block.3} parent=5 // pred_check
      %p321 = pneg %p320
    $region42: #{inception_block.3} parent=5 // pred_check_branch
      %323 = sbr.rel (%p321) target = $region44
    $region43: #{inception_block.3} parent=5 // pred_region
      %s324 = ssub.s32 %s10, 2
      // Predicated region
      $region45: #{inception_block.3} parent=43 // pred_check
        %p325 = pneg %p151
      $region46: #{inception_block.3} parent=43 // pred_check_branch
        %327 = sbr.rel (%p325) target = $region48
      $region47: #{inception_block.3} parent=43 // pred_region
        %s328 = smul.u32 2, %s22
        %p329 = scmp.lt.s32.totalorder %s21, 1
        %s330 = scalar_select %p329, %s21, 1
        %p331 = scmp.lt.s32.totalorder %s328, 1
        %s332 = scalar_select %p331, %s328, 1
        %s333 = smul.addr %s330, 2
        %s334 = sadd.s32 %s332, %s333
        %s335 = smul.addr %s334, 8
        %s336 = scalar_lea.vmem %s4, %s335
      $region48: #{inception_block.3} parent=43 // pred_fallthru
        _
    $region44: #{inception_block.3} parent=5 // pred_fallthru
      _
  $region6: #{inception_block.3} parent=0 // loop_footer
    %s14 = sadd.s32 1, %s10
  $region7: #{inception_block.3} parent=0 // loop_footer_branch
    %9 = sbr.rel target = $region3
  $region8: #{inception_block.3} parent=0 // loop_exit
    _

</llo_original>
